<compile_context>
chip_gen: v7x
topology: tpu7x:2x2x1
jax: 0.10.0
libtpu: 0.0.40
codegen_flags: <defaults>
</compile_context>

<pallas_src>
import numpy as np
import jax
import jax.numpy as jnp
from jax import lax
from jax.experimental import pallas as pl
from jax.experimental.pallas import tpu as pltpu

# ---------------- small synthetic config ----------------
B = 2              # batch
S = 16             # sequence length
H = 32             # "bert" hidden size (synthetic stand-in)
FFN = 4 * H        # 128
VOCAB = 100
E = 2              # entity slots per example
NSLOT = B * E      # actual entity-slot count (4)
NSLOTP = 8         # padded slot count -> native (8,128) tiles
HID = 256          # hidden_layer_dim (as in the module)
N_MAIN = 3
N_PROT, N_ANT, N_INN = 6, 12, 4
N_FINE = 22
OUT_PAD = 128      # lane-dense output slab width
FINE_OFF = 6       # fine logits start lane in the slab

# encoder weight-slab lane offsets (each region starts at a 128-lane boundary)
OFF_QKV = 0        # [H, 3H]  at lanes   0: 96
OFF_WF1 = 128      # [H, FFN] at lanes 128:256
OFF_WO = 256       # [H, H]   at lanes 256:288
W_XPW = 384
VEC_ROWS = 16      # bias / LayerNorm vector slab rows


def _layer_norm(x, g, b, eps=1e-12):
    mu = jnp.mean(x, axis=-1, keepdims=True)
    var = jnp.mean((x - mu) ** 2, axis=-1, keepdims=True)
    return (x - mu) * lax.rsqrt(var + eps) * g + b


# ============ fused kernel: encoder + pooling + classifier heads ============
def fused_kernel(x_ref, bias_ref, sel_ref, wxp_ref, wf2_ref, vec_ref,
                 w1c_ref, b1c_ref, w2p_ref, out_ref):
    x = x_ref[...]                                   # [B*S, H] f32
    wxp = wxp_ref[...]                               # [H, 384] f32
    vec = vec_ref[...]                               # [16, 128] f32

    wqkv = wxp[:, OFF_QKV:OFF_QKV + 3 * H]           # [H, 3H]
    wf1 = wxp[:, OFF_WF1:OFF_WF1 + FFN]              # [H, FFN]
    wo = wxp[:, OFF_WO:OFF_WO + H]                   # [H, H]

    bqkv = vec[0:1, 0:3 * H]
    bo = vec[1:2, 0:H]
    bf1 = vec[2:3, 0:FFN]
    bf2 = vec[3:4, 0:H]
    g1 = vec[4:5, 0:H]
    b1 = vec[5:6, 0:H]
    g2 = vec[6:7, 0:H]
    b2 = vec[7:8, 0:H]
    b2c = vec[8:9, :]                                # [1, 128]

    # ---- batch-stacked synthetic single-layer encoder ----------------------
    # TODO(synk): stand-in for the pretrained multi-layer/multi-head BERT.
    qkv = jnp.dot(x, wqkv, preferred_element_type=jnp.float32) + bqkv   # [BS, 3H]
    q = qkv[:, 0:H]
    k = qkv[:, H:2 * H]
    v = qkv[:, 2 * H:3 * H]

    # scores over the whole stacked slab; block-diagonal bias (built on host
    # from attention_mask) kills cross-batch attention.  No explicit k.T.
    scores = lax.dot_general(q, k, (((1,), (1,)), ((), ())),
                             preferred_element_type=jnp.float32) * (H ** -0.5)
    scores = scores + bias_ref[...]                                     # [BS, BS]
    mrow = jnp.max(scores, axis=-1, keepdims=True)
    p = jnp.exp(scores - mrow)
    p = p * pl.reciprocal(jnp.sum(p, axis=-1, keepdims=True), approx=True)

    ctx = jnp.dot(p, v, preferred_element_type=jnp.float32)             # [BS, H]
    attn = jnp.dot(ctx, wo, preferred_element_type=jnp.float32) + bo
    x1 = _layer_norm(x + attn, g1, b1)

    h1 = jax.nn.gelu(jnp.dot(x1, wf1, preferred_element_type=jnp.float32) + bf1,
                     approximate=True)
    ffn = jnp.dot(h1, wf2_ref[...], preferred_element_type=jnp.float32) + bf2
    seq = _layer_norm(x1 + ffn, g2, b2)                                  # [BS, H]

    # ---- entity left/span/right MEAN pooling: one mask-matmul --------------
    # sel_all has batch membership and exact 1/count folded in (host side),
    # so this matmul directly yields the means (empty regions -> zero rows).
    pooled = jnp.dot(sel_ref[...], seq,
                     preferred_element_type=jnp.float32)                 # [3*NSLOTP, H]
    emb = jnp.concatenate([pooled[0:NSLOTP],
                           pooled[NSLOTP:2 * NSLOTP],
                           pooled[2 * NSLOTP:3 * NSLOTP]], axis=-1)      # [NSLOTP, 3H]
    emb = jnp.where(jnp.isnan(emb), 0.0, emb)        # reference nan_to_num

    # ---- fused classifier heads (dropout = identity in eval mode) ----------
    # First layer: one [3H, 4*HID] matmul (bf16 MXU, f32 accumulation).
    raw = jnp.dot(emb.astype(jnp.bfloat16), w1c_ref[...],
                  preferred_element_type=jnp.float32) + b1c_ref[...]     # [NSLOTP, 4*HID]
    hid = jnp.maximum(raw, 0.0)

    # Second layer at K=256: stack the 4 head chunks along sublanes and hit
    # a single packed [HID, 128] weight, then mask + block-sum the head rows.
    hid_stacked = jnp.concatenate(
        [hid[:, 0:HID], hid[:, HID:2 * HID],
         hid[:, 2 * HID:3 * HID], hid[:, 3 * HID:4 * HID]], axis=0)      # [4*NSLOTP, HID]
    z = jnp.dot(hid_stacked.astype(jnp.bfloat16), w2p_ref[...],
                preferred_element_type=jnp.float32)                      # [4*NSLOTP, 128]

    # fixed lane-class masks (single iota, constant-folded compares)
    lane = lax.broadcasted_iota(jnp.int32, (NSLOTP, OUT_PAD), 1)
    main_l = lane < N_MAIN                                               # [0:3)
    dup_l = jnp.logical_and(lane >= N_MAIN, lane < 2 * N_MAIN)           # [3:6)
    main6_l = lane < 2 * N_MAIN
    prot_l = jnp.logical_and(lane >= FINE_OFF, lane < FINE_OFF + N_PROT)
    ant_l = jnp.logical_and(lane >= FINE_OFF + N_PROT,
                            lane < FINE_OFF + N_PROT + N_ANT)
    inn_l = jnp.logical_and(lane >= FINE_OFF + N_PROT + N_ANT,
                            lane < FINE_OFF + N_FINE)

    logits_all = (jnp.where(main6_l, z[0:NSLOTP], 0.0)
                  + jnp.where(prot_l, z[NSLOTP:2 * NSLOTP], 0.0)
                  + jnp.where(ant_l, z[2 * NSLOTP:3 * NSLOTP], 0.0)
                  + jnp.where(inn_l, z[3 * NSLOTP:4 * NSLOTP], 0.0)
                  + b2c)                                                 # [NSLOTP, 128]

    # main-role softmax (exact division) over the duplicate copy at lanes 3:6
    m_main = jnp.max(jnp.where(main_l, logits_all, jnp.float32(-1e30)),
                     axis=-1, keepdims=True)
    ex = jnp.where(dup_l, jnp.exp(logits_all - m_main), 0.0)
    probs = ex / jnp.sum(ex, axis=-1, keepdims=True)

    # argmax routing on lanes 0:3 with first-index tie-break (torch.argmax)
    l0 = logits_all[:, 0:1]
    l1 = logits_all[:, 1:2]
    l2 = logits_all[:, 2:3]
    is0 = l0 >= jnp.maximum(l1, l2)
    is1 = jnp.logical_and(jnp.logical_not(is0), l1 >= l2)
    is2 = jnp.logical_and(jnp.logical_not(is0), jnp.logical_not(is1))

    keep = (jnp.logical_and(is0, prot_l)
            | jnp.logical_and(is1, ant_l)
            | jnp.logical_and(is2, inn_l))
    fine = jnp.where(keep, jax.nn.sigmoid(logits_all), 0.0)

    # lane-dense store: [0:3] logits | [3:6] probs | [6:28] routed fine | zeros
    out_ref[...] = jnp.where(main_l, logits_all, 0.0) + probs + fine


def run_fused(x_stack, attn_bias, sel_all, w_xproj, w_f2, vec_slab,
              w1c, b1c, w2pack):
    inputs = (x_stack, attn_bias, sel_all, w_xproj, w_f2, vec_slab,
              w1c, b1c, w2pack)
    return pl.pallas_call(
        fused_kernel,
        out_shape=jax.ShapeDtypeStruct((NSLOTP, OUT_PAD), jnp.float32),
        in_specs=[pl.BlockSpec(memory_space=pltpu.MemorySpace.VMEM)
                  for _ in inputs],
        out_specs=pl.BlockSpec(memory_space=pltpu.MemorySpace.VMEM),
    )(*inputs)


# ===================== params, embeddings, forward glue =====================
def init_params(seed=0):
    key = jax.random.PRNGKey(seed)
    ks = iter(jax.random.split(key, 64))

    def nrm(shape, scale=0.02):
        return jax.random.normal(next(ks), shape, jnp.float32) * scale

    emb = dict(word=nrm((VOCAB, H)), pos=nrm((S, H)), type=nrm((2, H)),
               ln_g=jnp.ones((1, H), jnp.float32),
               ln_b=jnp.zeros((1, H), jnp.float32))

    # synthetic single-layer encoder weights, packed into lane-dense slabs
    wq, wk, wv, wo = nrm((H, H)), nrm((H, H)), nrm((H, H)), nrm((H, H))
    bq, bk, bv, bo = nrm((1, H)), nrm((1, H)), nrm((1, H)), nrm((1, H))
    wf1, bf1 = nrm((H, FFN)), nrm((1, FFN))
    wf2, bf2 = nrm((FFN, H)), nrm((1, H))
    g1 = jnp.ones((1, H), jnp.float32)
    b1 = jnp.zeros((1, H), jnp.float32)
    g2 = jnp.ones((1, H), jnp.float32)
    b2 = jnp.zeros((1, H), jnp.float32)

    w_xproj = jnp.zeros((H, W_XPW), jnp.float32)
    w_xproj = w_xproj.at[:, OFF_QKV:OFF_QKV + 3 * H].set(
        jnp.concatenate([wq, wk, wv], axis=1))
    w_xproj = w_xproj.at[:, OFF_WF1:OFF_WF1 + FFN].set(wf1)
    w_xproj = w_xproj.at[:, OFF_WO:OFF_WO + H].set(wo)

    vec = jnp.zeros((VEC_ROWS, OUT_PAD), jnp.float32)
    vec = vec.at[0, 0:3 * H].set(jnp.concatenate([bq, bk, bv], axis=1)[0])
    vec = vec.at[1, 0:H].set(bo[0])
    vec = vec.at[2, 0:FFN].set(bf1[0])
    vec = vec.at[3, 0:H].set(bf2[0])
    vec = vec.at[4, 0:H].set(g1[0])
    vec = vec.at[5, 0:H].set(b1[0])
    vec = vec.at[6, 0:H].set(g2[0])
    vec = vec.at[7, 0:H].set(b2[0])

    # per-head classifier params, as in the PyTorch module
    w1m, b1m = nrm((3 * H, HID)), nrm((1, HID))
    w2m, b2m = nrm((HID, N_MAIN)), nrm((1, N_MAIN))
    w1p, b1p = nrm((3 * H, HID)), nrm((1, HID))
    w2p, b2p = nrm((HID, N_PROT)), nrm((1, N_PROT))
    w1a, b1a = nrm((3 * H, HID)), nrm((1, HID))
    w2a, b2a = nrm((HID, N_ANT)), nrm((1, N_ANT))
    w1i, b1i = nrm((3 * H, HID)), nrm((1, HID))
    w2i, b2i = nrm((HID, N_INN)), nrm((1, N_INN))

    # fused first layer [3H, 4*HID]; packed K=256 second layer [HID, 128]
    w1c = jnp.concatenate([w1m, w1p, w1a, w1i], axis=1).astype(jnp.bfloat16)
    b1c = jnp.concatenate([b1m, b1p, b1a, b1i], axis=1)          # f32 [1, 1024]

    w2pack = jnp.zeros((HID, OUT_PAD), jnp.float32)
    w2pack = w2pack.at[:, 0:3].set(w2m)
    w2pack = w2pack.at[:, 3:6].set(w2m)       # duplicate -> in-place softmax lanes
    w2pack = w2pack.at[:, 6:12].set(w2p)
    w2pack = w2pack.at[:, 12:24].set(w2a)
    w2pack = w2pack.at[:, 24:28].set(w2i)
    w2pack = w2pack.astype(jnp.bfloat16)

    vec = vec.at[8, 0:3].set(b2m[0])
    vec = vec.at[8, 3:6].set(b2m[0])
    vec = vec.at[8, 6:12].set(b2p[0])
    vec = vec.at[8, 12:24].set(b2a[0])
    vec = vec.at[8, 24:28].set(b2i[0])

    return dict(emb=emb, w_xproj=w_xproj, w_f2=wf2, vec=vec,
                w1c=w1c, b1c=b1c, w2pack=w2pack)


def embed(input_ids, token_type_ids, ep):
    x = ep['word'][input_ids] + ep['pos'][None, :S, :] + ep['type'][token_type_ids]
    mu = jnp.mean(x, axis=-1, keepdims=True)
    var = jnp.mean((x - mu) ** 2, axis=-1, keepdims=True)
    return (x - mu) * lax.rsqrt(var + 1e-12) * ep['ln_g'] + ep['ln_b']


def forward(params, input_ids, attention_mask, token_type_ids,
            entity_start_positions, entity_end_positions):
    # Host-built pooling matrix: static NSLOTP slots; batch membership and the
    # exact 1/count mean division are folded in (empty left/right -> zero rows,
    # matching the torch.zeros fallback).
    es = np.asarray(entity_start_positions)
    ee = np.asarray(entity_end_positions)
    sel = np.zeros((3 * NSLOTP, B * S), np.float32)
    slot = 0
    for i in range(es.shape[0]):
        for s_, e_ in zip(es[i], ee[i]):
            if s_ == -1 or e_ == -1:
                continue
            s_i, e_i = int(s_), int(e_)
            base = i * S
            if s_i > 0:
                sel[slot, base:base + s_i] = 1.0 / s_i
            sel[NSLOTP + slot, base + s_i:base + e_i + 1] = 1.0 / (e_i - s_i + 1)
            if e_i + 1 < S:
                sel[2 * NSLOTP + slot, base + e_i + 1:base + S] = 1.0 / (S - 1 - e_i)
            slot += 1
    n_valid = slot

    # batch-stacked embeddings + block-diagonal key bias (batch + pad masking)
    x_stack = embed(input_ids, token_type_ids, params['emb']).reshape(B * S, H)
    m = attention_mask.astype(jnp.float32)                         # [B, S]
    same = jnp.kron(jnp.eye(B, dtype=jnp.float32), jnp.ones((S, S), jnp.float32))
    allowed = same * m.reshape(1, B * S)
    attn_bias = (1.0 - allowed) * jnp.float32(-1e9)                # [BS, BS]

    slab = run_fused(x_stack, attn_bias, jnp.asarray(sel),
                     params['w_xproj'], params['w_f2'], params['vec'],
                     params['w1c'], params['b1c'], params['w2pack'])

    return {'main_role_logits': slab[:n_valid, 0:N_MAIN],
            'main_role_probs': slab[:n_valid, N_MAIN:2 * N_MAIN],
            'fine_logits': slab[:n_valid, FINE_OFF:FINE_OFF + N_FINE]}


if __name__ == "__main__":
    params = init_params(0)

    key = jax.random.PRNGKey(0)
    input_ids = jax.random.randint(key, (B, S), 0, VOCAB, dtype=jnp.int32)
    attention_mask = jnp.ones((B, S), jnp.int32)
    token_type_ids = jnp.zeros((B, S), jnp.int32)
    entity_start_positions = jnp.array([[1, 5], [0, 8]], jnp.int32)
    entity_end_positions = jnp.array([[3, 6], [2, S - 1]], jnp.int32)

    out = forward(params, input_ids, attention_mask, token_type_ids,
                  entity_start_positions, entity_end_positions)
    out = jax.block_until_ready(out)

    n_ent = B * E
    assert out['main_role_logits'].shape == (n_ent, N_MAIN)
    assert out['main_role_probs'].shape == (n_ent, N_MAIN)
    assert out['fine_logits'].shape == (n_ent, N_FINE)
    assert bool(jnp.all(jnp.isfinite(out['main_role_logits'])))
    assert bool(jnp.all(jnp.isfinite(out['fine_logits'])))
    assert bool(jnp.all(jnp.abs(jnp.sum(out['main_role_probs'], axis=-1) - 1.0) < 1e-3))
    print("KERNEL_OK")
</pallas_src>

<mosaic_0001>
module attributes {stable_mosaic.version = 11 : i64} {
  func.func @fused_kernel(%arg0: memref<32x32xf32, #tpu.memory_space<vmem>>, %arg1: memref<32x32xf32, #tpu.memory_space<vmem>>, %arg2: memref<24x32xf32, #tpu.memory_space<vmem>>, %arg3: memref<32x384xf32, #tpu.memory_space<vmem>>, %arg4: memref<128x32xf32, #tpu.memory_space<vmem>>, %arg5: memref<16x128xf32, #tpu.memory_space<vmem>>, %arg6: memref<96x1024xbf16, #tpu.memory_space<vmem>>, %arg7: memref<1x1024xf32, #tpu.memory_space<vmem>>, %arg8: memref<256x128xbf16, #tpu.memory_space<vmem>>, %arg9: memref<8x128xf32, #tpu.memory_space<vmem>>) attributes {dimension_semantics = [], scalar_prefetch = 0 : i64, scratch_operands = 0 : i64, tpu.core_type = #tpu.core_type<tc>} {
    %c0 = arith.constant 0 : index
    %c0_0 = arith.constant 0 : index
    %0 = vector.load %arg0[%c0, %c0_0] : memref<32x32xf32, #tpu.memory_space<vmem>>, vector<32x32xf32>
    %c0_1 = arith.constant 0 : index
    %c0_2 = arith.constant 0 : index
    %1 = vector.load %arg3[%c0_1, %c0_2] : memref<32x384xf32, #tpu.memory_space<vmem>>, vector<32x384xf32>
    %c0_3 = arith.constant 0 : index
    %c0_4 = arith.constant 0 : index
    %2 = vector.load %arg5[%c0_3, %c0_4] : memref<16x128xf32, #tpu.memory_space<vmem>>, vector<16x128xf32>
    %3 = vector.extract_strided_slice %1 {offsets = [0, 0], sizes = [32, 96], strides = [1, 1]} : vector<32x384xf32> to vector<32x96xf32>
    %4 = vector.extract_strided_slice %1 {offsets = [0, 128], sizes = [32, 128], strides = [1, 1]} : vector<32x384xf32> to vector<32x128xf32>
    %5 = vector.extract_strided_slice %1 {offsets = [0, 256], sizes = [32, 32], strides = [1, 1]} : vector<32x384xf32> to vector<32x32xf32>
    %6 = vector.extract_strided_slice %2 {offsets = [0, 0], sizes = [1, 96], strides = [1, 1]} : vector<16x128xf32> to vector<1x96xf32>
    %7 = vector.extract_strided_slice %2 {offsets = [1, 0], sizes = [1, 32], strides = [1, 1]} : vector<16x128xf32> to vector<1x32xf32>
    %8 = vector.extract_strided_slice %2 {offsets = [2, 0], sizes = [1, 128], strides = [1, 1]} : vector<16x128xf32> to vector<1x128xf32>
    %9 = vector.extract_strided_slice %2 {offsets = [3, 0], sizes = [1, 32], strides = [1, 1]} : vector<16x128xf32> to vector<1x32xf32>
    %10 = vector.extract_strided_slice %2 {offsets = [4, 0], sizes = [1, 32], strides = [1, 1]} : vector<16x128xf32> to vector<1x32xf32>
    %11 = vector.extract_strided_slice %2 {offsets = [5, 0], sizes = [1, 32], strides = [1, 1]} : vector<16x128xf32> to vector<1x32xf32>
    %12 = vector.extract_strided_slice %2 {offsets = [6, 0], sizes = [1, 32], strides = [1, 1]} : vector<16x128xf32> to vector<1x32xf32>
    %13 = vector.extract_strided_slice %2 {offsets = [7, 0], sizes = [1, 32], strides = [1, 1]} : vector<16x128xf32> to vector<1x32xf32>
    %14 = vector.extract_strided_slice %2 {offsets = [8, 0], sizes = [1, 128], strides = [1, 1]} : vector<16x128xf32> to vector<1x128xf32>
    %cst = arith.constant dense<0.000000e+00> : vector<32x96xf32>
    %15 = tpu.matmul %0, %3, %cst {dimension_numbers = #tpu.dot_dimension_numbers<[1], [0], [0], [1], [0, 0, 1, 1], [], []>} : vector<32x32xf32>, vector<32x96xf32>, vector<32x96xf32> -> vector<32x96xf32>
    %16 = vector.broadcast %6 : vector<1x96xf32> to vector<32x96xf32>
    %17 = arith.addf %15, %16 : vector<32x96xf32>
    %18 = vector.extract_strided_slice %17 {offsets = [0, 0], sizes = [32, 32], strides = [1, 1]} : vector<32x96xf32> to vector<32x32xf32>
    %19 = vector.extract_strided_slice %17 {offsets = [0, 32], sizes = [32, 32], strides = [1, 1]} : vector<32x96xf32> to vector<32x32xf32>
    %20 = vector.extract_strided_slice %17 {offsets = [0, 64], sizes = [32, 32], strides = [1, 1]} : vector<32x96xf32> to vector<32x32xf32>
    %cst_5 = arith.constant dense<0.000000e+00> : vector<32x32xf32>
    %21 = tpu.matmul %18, %19, %cst_5 {dimension_numbers = #tpu.dot_dimension_numbers<[1], [1], [0], [0], [0, 0, 1, 0], [], []>} : vector<32x32xf32>, vector<32x32xf32>, vector<32x32xf32> -> vector<32x32xf32>
    %cst_6 = arith.constant 0.176776692 : f32
    %22 = vector.broadcast %cst_6 : f32 to vector<32x32xf32>
    %23 = arith.mulf %21, %22 : vector<32x32xf32>
    %c0_7 = arith.constant 0 : index
    %c0_8 = arith.constant 0 : index
    %24 = vector.load %arg1[%c0_7, %c0_8] : memref<32x32xf32, #tpu.memory_space<vmem>>, vector<32x32xf32>
    %25 = arith.addf %23, %24 : vector<32x32xf32>
    %cst_9 = arith.constant dense<0xFF800000> : vector<32xf32>
    %26 = vector.multi_reduction <maximumf>, %25, %cst_9 [1] : vector<32x32xf32> to vector<32xf32>
    %27 = vector.shape_cast %26 : vector<32xf32> to vector<32x1xf32>
    %28 = vector.broadcast %27 : vector<32x1xf32> to vector<32x32xf32>
    %29 = arith.subf %25, %28 : vector<32x32xf32>
    %30 = math.exp %29 : vector<32x32xf32>
    %cst_10 = arith.constant dense<0.000000e+00> : vector<32xf32>
    %31 = vector.multi_reduction <add>, %30, %cst_10 [1] : vector<32x32xf32> to vector<32xf32>
    %32 = vector.shape_cast %31 : vector<32xf32> to vector<32x1xf32>
    %33 = tpu.reciprocal %32 {approx = true} : vector<32x1xf32> -> vector<32x1xf32>
    %34 = vector.broadcast %33 : vector<32x1xf32> to vector<32x32xf32>
    %35 = arith.mulf %30, %34 : vector<32x32xf32>
    %cst_11 = arith.constant dense<0.000000e+00> : vector<32x32xf32>
    %36 = tpu.matmul %35, %20, %cst_11 {dimension_numbers = #tpu.dot_dimension_numbers<[1], [0], [0], [1], [0, 0, 1, 1], [], []>} : vector<32x32xf32>, vector<32x32xf32>, vector<32x32xf32> -> vector<32x32xf32>
    %cst_12 = arith.constant dense<0.000000e+00> : vector<32x32xf32>
    %37 = tpu.matmul %36, %5, %cst_12 {dimension_numbers = #tpu.dot_dimension_numbers<[1], [0], [0], [1], [0, 0, 1, 1], [], []>} : vector<32x32xf32>, vector<32x32xf32>, vector<32x32xf32> -> vector<32x32xf32>
    %38 = vector.broadcast %7 : vector<1x32xf32> to vector<32x32xf32>
    %39 = arith.addf %37, %38 : vector<32x32xf32>
    %40 = arith.addf %0, %39 : vector<32x32xf32>
    %cst_13 = arith.constant dense<0.000000e+00> : vector<32xf32>
    %41 = vector.multi_reduction <add>, %40, %cst_13 [1] : vector<32x32xf32> to vector<32xf32>
    %42 = vector.shape_cast %41 : vector<32xf32> to vector<32x1xf32>
    %cst_14 = arith.constant 3.200000e+01 : f32
    %43 = vector.broadcast %cst_14 : f32 to vector<32x1xf32>
    %44 = arith.divf %42, %43 : vector<32x1xf32>
    %45 = vector.broadcast %44 : vector<32x1xf32> to vector<32x32xf32>
    %46 = arith.subf %40, %45 : vector<32x32xf32>
    %47 = arith.mulf %46, %46 : vector<32x32xf32>
    %cst_15 = arith.constant dense<0.000000e+00> : vector<32xf32>
    %48 = vector.multi_reduction <add>, %47, %cst_15 [1] : vector<32x32xf32> to vector<32xf32>
    %49 = vector.shape_cast %48 : vector<32xf32> to vector<32x1xf32>
    %cst_16 = arith.constant 3.200000e+01 : f32
    %50 = vector.broadcast %cst_16 : f32 to vector<32x1xf32>
    %51 = arith.divf %49, %50 : vector<32x1xf32>
    %52 = vector.broadcast %44 : vector<32x1xf32> to vector<32x32xf32>
    %53 = arith.subf %40, %52 : vector<32x32xf32>
    %cst_17 = arith.constant 9.99999996E-13 : f32
    %54 = vector.broadcast %cst_17 : f32 to vector<32x1xf32>
    %55 = arith.addf %51, %54 : vector<32x1xf32>
    %56 = math.rsqrt %55 : vector<32x1xf32>
    %57 = vector.broadcast %56 : vector<32x1xf32> to vector<32x32xf32>
    %58 = arith.mulf %53, %57 : vector<32x32xf32>
    %59 = vector.broadcast %10 : vector<1x32xf32> to vector<32x32xf32>
    %60 = arith.mulf %58, %59 : vector<32x32xf32>
    %61 = vector.broadcast %11 : vector<1x32xf32> to vector<32x32xf32>
    %62 = arith.addf %60, %61 : vector<32x32xf32>
    %cst_18 = arith.constant dense<0.000000e+00> : vector<32x128xf32>
    %63 = tpu.matmul %62, %4, %cst_18 {dimension_numbers = #tpu.dot_dimension_numbers<[1], [0], [0], [1], [0, 0, 1, 1], [], []>} : vector<32x32xf32>, vector<32x128xf32>, vector<32x128xf32> -> vector<32x128xf32>
    %64 = vector.broadcast %8 : vector<1x128xf32> to vector<32x128xf32>
    %65 = arith.addf %63, %64 : vector<32x128xf32>
    %66 = arith.mulf %65, %65 : vector<32x128xf32>
    %67 = arith.mulf %65, %66 : vector<32x128xf32>
    %cst_19 = arith.constant 4.471500e-02 : f32
    %68 = vector.broadcast %cst_19 : f32 to vector<32x128xf32>
    %69 = arith.mulf %68, %67 : vector<32x128xf32>
    %70 = arith.addf %65, %69 : vector<32x128xf32>
    %cst_20 = arith.constant 0.797884583 : f32
    %71 = vector.broadcast %cst_20 : f32 to vector<32x128xf32>
    %72 = arith.mulf %71, %70 : vector<32x128xf32>
    %73 = math.tanh %72 : vector<32x128xf32>
    %cst_21 = arith.constant 1.000000e+00 : f32
    %74 = vector.broadcast %cst_21 : f32 to vector<32x128xf32>
    %75 = arith.addf %74, %73 : vector<32x128xf32>
    %cst_22 = arith.constant 5.000000e-01 : f32
    %76 = vector.broadcast %cst_22 : f32 to vector<32x128xf32>
    %77 = arith.mulf %76, %75 : vector<32x128xf32>
    %78 = arith.mulf %65, %77 : vector<32x128xf32>
    %c0_23 = arith.constant 0 : index
    %c0_24 = arith.constant 0 : index
    %79 = vector.load %arg4[%c0_23, %c0_24] : memref<128x32xf32, #tpu.memory_space<vmem>>, vector<128x32xf32>
    %cst_25 = arith.constant dense<0.000000e+00> : vector<32x32xf32>
    %80 = tpu.matmul %78, %79, %cst_25 {dimension_numbers = #tpu.dot_dimension_numbers<[1], [0], [0], [1], [0, 0, 1, 1], [], []>} : vector<32x128xf32>, vector<128x32xf32>, vector<32x32xf32> -> vector<32x32xf32>
    %81 = vector.broadcast %9 : vector<1x32xf32> to vector<32x32xf32>
    %82 = arith.addf %80, %81 : vector<32x32xf32>
    %83 = arith.addf %62, %82 : vector<32x32xf32>
    %cst_26 = arith.constant dense<0.000000e+00> : vector<32xf32>
    %84 = vector.multi_reduction <add>, %83, %cst_26 [1] : vector<32x32xf32> to vector<32xf32>
    %85 = vector.shape_cast %84 : vector<32xf32> to vector<32x1xf32>
    %cst_27 = arith.constant 3.200000e+01 : f32
    %86 = vector.broadcast %cst_27 : f32 to vector<32x1xf32>
    %87 = arith.divf %85, %86 : vector<32x1xf32>
    %88 = vector.broadcast %87 : vector<32x1xf32> to vector<32x32xf32>
    %89 = arith.subf %83, %88 : vector<32x32xf32>
    %90 = arith.mulf %89, %89 : vector<32x32xf32>
    %cst_28 = arith.constant dense<0.000000e+00> : vector<32xf32>
    %91 = vector.multi_reduction <add>, %90, %cst_28 [1] : vector<32x32xf32> to vector<32xf32>
    %92 = vector.shape_cast %91 : vector<32xf32> to vector<32x1xf32>
    %cst_29 = arith.constant 3.200000e+01 : f32
    %93 = vector.broadcast %cst_29 : f32 to vector<32x1xf32>
    %94 = arith.divf %92, %93 : vector<32x1xf32>
    %95 = vector.broadcast %87 : vector<32x1xf32> to vector<32x32xf32>
    %96 = arith.subf %83, %95 : vector<32x32xf32>
    %cst_30 = arith.constant 9.99999996E-13 : f32
    %97 = vector.broadcast %cst_30 : f32 to vector<32x1xf32>
    %98 = arith.addf %94, %97 : vector<32x1xf32>
    %99 = math.rsqrt %98 : vector<32x1xf32>
    %100 = vector.broadcast %99 : vector<32x1xf32> to vector<32x32xf32>
    %101 = arith.mulf %96, %100 : vector<32x32xf32>
    %102 = vector.broadcast %12 : vector<1x32xf32> to vector<32x32xf32>
    %103 = arith.mulf %101, %102 : vector<32x32xf32>
    %104 = vector.broadcast %13 : vector<1x32xf32> to vector<32x32xf32>
    %105 = arith.addf %103, %104 : vector<32x32xf32>
    %c0_31 = arith.constant 0 : index
    %c0_32 = arith.constant 0 : index
    %106 = vector.load %arg2[%c0_31, %c0_32] : memref<24x32xf32, #tpu.memory_space<vmem>>, vector<24x32xf32>
    %cst_33 = arith.constant dense<0.000000e+00> : vector<24x32xf32>
    %107 = tpu.matmul %106, %105, %cst_33 {dimension_numbers = #tpu.dot_dimension_numbers<[1], [0], [0], [1], [0, 0, 1, 1], [], []>} : vector<24x32xf32>, vector<32x32xf32>, vector<24x32xf32> -> vector<24x32xf32>
    %108 = vector.extract_strided_slice %107 {offsets = [0, 0], sizes = [8, 32], strides = [1, 1]} : vector<24x32xf32> to vector<8x32xf32>
    %109 = vector.extract_strided_slice %107 {offsets = [8, 0], sizes = [8, 32], strides = [1, 1]} : vector<24x32xf32> to vector<8x32xf32>
    %110 = vector.extract_strided_slice %107 {offsets = [16, 0], sizes = [8, 32], strides = [1, 1]} : vector<24x32xf32> to vector<8x32xf32>
    %111 = tpu.concatenate %108, %109, %110 in 1 : vector<8x32xf32>, vector<8x32xf32>, vector<8x32xf32> -> vector<8x96xf32>
    %112 = arith.cmpf one, %111, %111 : vector<8x96xf32>
    %cst_34 = arith.constant 0.000000e+00 : f32
    %113 = vector.broadcast %cst_34 : f32 to vector<8x96xf32>
    %114 = arith.select %112, %113, %111 : vector<8x96xi1>, vector<8x96xf32>
    %115 = arith.truncf %114 : vector<8x96xf32> to vector<8x96xbf16>
    %c0_35 = arith.constant 0 : index
    %c0_36 = arith.constant 0 : index
    %116 = vector.load %arg6[%c0_35, %c0_36] : memref<96x1024xbf16, #tpu.memory_space<vmem>>, vector<96x1024xbf16>
    %cst_37 = arith.constant dense<0.000000e+00> : vector<8x1024xf32>
    %117 = tpu.matmul %115, %116, %cst_37 {dimension_numbers = #tpu.dot_dimension_numbers<[1], [0], [0], [1], [0, 0, 1, 1], [], []>} : vector<8x96xbf16>, vector<96x1024xbf16>, vector<8x1024xf32> -> vector<8x1024xf32>
    %c0_38 = arith.constant 0 : index
    %c0_39 = arith.constant 0 : index
    %118 = vector.load %arg7[%c0_38, %c0_39] : memref<1x1024xf32, #tpu.memory_space<vmem>>, vector<1x1024xf32>
    %119 = vector.broadcast %118 : vector<1x1024xf32> to vector<8x1024xf32>
    %120 = arith.addf %117, %119 : vector<8x1024xf32>
    %cst_40 = arith.constant 0.000000e+00 : f32
    %121 = vector.broadcast %cst_40 : f32 to vector<8x1024xf32>
    %122 = arith.maximumf %120, %121 : vector<8x1024xf32>
    %123 = vector.extract_strided_slice %122 {offsets = [0, 0], sizes = [8, 256], strides = [1, 1]} : vector<8x1024xf32> to vector<8x256xf32>
    %124 = vector.extract_strided_slice %122 {offsets = [0, 256], sizes = [8, 256], strides = [1, 1]} : vector<8x1024xf32> to vector<8x256xf32>
    %125 = vector.extract_strided_slice %122 {offsets = [0, 512], sizes = [8, 256], strides = [1, 1]} : vector<8x1024xf32> to vector<8x256xf32>
    %126 = vector.extract_strided_slice %122 {offsets = [0, 768], sizes = [8, 256], strides = [1, 1]} : vector<8x1024xf32> to vector<8x256xf32>
    %127 = tpu.concatenate %123, %124, %125, %126 in 0 : vector<8x256xf32>, vector<8x256xf32>, vector<8x256xf32>, vector<8x256xf32> -> vector<32x256xf32>
    %128 = arith.truncf %127 : vector<32x256xf32> to vector<32x256xbf16>
    %c0_41 = arith.constant 0 : index
    %c0_42 = arith.constant 0 : index
    %129 = vector.load %arg8[%c0_41, %c0_42] : memref<256x128xbf16, #tpu.memory_space<vmem>>, vector<256x128xbf16>
    %cst_43 = arith.constant dense<0.000000e+00> : vector<32x128xf32>
    %130 = tpu.matmul %128, %129, %cst_43 {dimension_numbers = #tpu.dot_dimension_numbers<[1], [0], [0], [1], [0, 0, 1, 1], [], []>} : vector<32x256xbf16>, vector<256x128xbf16>, vector<32x128xf32> -> vector<32x128xf32>
    %131 = tpu.iota {dimensions = array<i32: 1>} : vector<8x128xi32>
    %c3_i32 = arith.constant 3 : i32
    %132 = vector.broadcast %c3_i32 : i32 to vector<8x128xi32>
    %133 = arith.cmpi slt, %131, %132 : vector<8x128xi32>
    %c3_i32_44 = arith.constant 3 : i32
    %134 = vector.broadcast %c3_i32_44 : i32 to vector<8x128xi32>
    %135 = arith.cmpi sge, %131, %134 : vector<8x128xi32>
    %c6_i32 = arith.constant 6 : i32
    %136 = vector.broadcast %c6_i32 : i32 to vector<8x128xi32>
    %137 = arith.cmpi slt, %131, %136 : vector<8x128xi32>
    %138 = arith.andi %135, %137 : vector<8x128xi1>
    %c6_i32_45 = arith.constant 6 : i32
    %139 = vector.broadcast %c6_i32_45 : i32 to vector<8x128xi32>
    %140 = arith.cmpi slt, %131, %139 : vector<8x128xi32>
    %c6_i32_46 = arith.constant 6 : i32
    %141 = vector.broadcast %c6_i32_46 : i32 to vector<8x128xi32>
    %142 = arith.cmpi sge, %131, %141 : vector<8x128xi32>
    %c12_i32 = arith.constant 12 : i32
    %143 = vector.broadcast %c12_i32 : i32 to vector<8x128xi32>
    %144 = arith.cmpi slt, %131, %143 : vector<8x128xi32>
    %145 = arith.andi %142, %144 : vector<8x128xi1>
    %c12_i32_47 = arith.constant 12 : i32
    %146 = vector.broadcast %c12_i32_47 : i32 to vector<8x128xi32>
    %147 = arith.cmpi sge, %131, %146 : vector<8x128xi32>
    %c24_i32 = arith.constant 24 : i32
    %148 = vector.broadcast %c24_i32 : i32 to vector<8x128xi32>
    %149 = arith.cmpi slt, %131, %148 : vector<8x128xi32>
    %150 = arith.andi %147, %149 : vector<8x128xi1>
    %c24_i32_48 = arith.constant 24 : i32
    %151 = vector.broadcast %c24_i32_48 : i32 to vector<8x128xi32>
    %152 = arith.cmpi sge, %131, %151 : vector<8x128xi32>
    %c28_i32 = arith.constant 28 : i32
    %153 = vector.broadcast %c28_i32 : i32 to vector<8x128xi32>
    %154 = arith.cmpi slt, %131, %153 : vector<8x128xi32>
    %155 = arith.andi %152, %154 : vector<8x128xi1>
    %156 = vector.extract_strided_slice %130 {offsets = [0, 0], sizes = [8, 128], strides = [1, 1]} : vector<32x128xf32> to vector<8x128xf32>
    %cst_49 = arith.constant 0.000000e+00 : f32
    %157 = vector.broadcast %cst_49 : f32 to vector<8x128xf32>
    %158 = arith.select %140, %156, %157 : vector<8x128xi1>, vector<8x128xf32>
    %159 = vector.extract_strided_slice %130 {offsets = [8, 0], sizes = [8, 128], strides = [1, 1]} : vector<32x128xf32> to vector<8x128xf32>
    %cst_50 = arith.constant 0.000000e+00 : f32
    %160 = vector.broadcast %cst_50 : f32 to vector<8x128xf32>
    %161 = arith.select %145, %159, %160 : vector<8x128xi1>, vector<8x128xf32>
    %162 = arith.addf %158, %161 : vector<8x128xf32>
    %163 = vector.extract_strided_slice %130 {offsets = [16, 0], sizes = [8, 128], strides = [1, 1]} : vector<32x128xf32> to vector<8x128xf32>
    %cst_51 = arith.constant 0.000000e+00 : f32
    %164 = vector.broadcast %cst_51 : f32 to vector<8x128xf32>
    %165 = arith.select %150, %163, %164 : vector<8x128xi1>, vector<8x128xf32>
    %166 = arith.addf %162, %165 : vector<8x128xf32>
    %167 = vector.extract_strided_slice %130 {offsets = [24, 0], sizes = [8, 128], strides = [1, 1]} : vector<32x128xf32> to vector<8x128xf32>
    %cst_52 = arith.constant 0.000000e+00 : f32
    %168 = vector.broadcast %cst_52 : f32 to vector<8x128xf32>
    %169 = arith.select %155, %167, %168 : vector<8x128xi1>, vector<8x128xf32>
    %170 = arith.addf %166, %169 : vector<8x128xf32>
    %171 = vector.broadcast %14 : vector<1x128xf32> to vector<8x128xf32>
    %172 = arith.addf %170, %171 : vector<8x128xf32>
    %cst_53 = arith.constant -1.000000e+30 : f32
    %173 = vector.broadcast %cst_53 : f32 to vector<8x128xf32>
    %174 = arith.select %133, %172, %173 : vector<8x128xi1>, vector<8x128xf32>
    %cst_54 = arith.constant dense<0xFF800000> : vector<8xf32>
    %175 = vector.multi_reduction <maximumf>, %174, %cst_54 [1] : vector<8x128xf32> to vector<8xf32>
    %176 = vector.shape_cast %175 : vector<8xf32> to vector<8x1xf32>
    %177 = vector.broadcast %176 : vector<8x1xf32> to vector<8x128xf32>
    %178 = arith.subf %172, %177 : vector<8x128xf32>
    %179 = math.exp %178 : vector<8x128xf32>
    %cst_55 = arith.constant 0.000000e+00 : f32
    %180 = vector.broadcast %cst_55 : f32 to vector<8x128xf32>
    %181 = arith.select %138, %179, %180 : vector<8x128xi1>, vector<8x128xf32>
    %cst_56 = arith.constant dense<0.000000e+00> : vector<8xf32>
    %182 = vector.multi_reduction <add>, %181, %cst_56 [1] : vector<8x128xf32> to vector<8xf32>
    %183 = vector.shape_cast %182 : vector<8xf32> to vector<8x1xf32>
    %184 = vector.broadcast %183 : vector<8x1xf32> to vector<8x128xf32>
    %185 = arith.divf %181, %184 : vector<8x128xf32>
    %186 = vector.extract_strided_slice %172 {offsets = [0, 0], sizes = [8, 1], strides = [1, 1]} : vector<8x128xf32> to vector<8x1xf32>
    %187 = vector.extract_strided_slice %172 {offsets = [0, 1], sizes = [8, 1], strides = [1, 1]} : vector<8x128xf32> to vector<8x1xf32>
    %188 = vector.extract_strided_slice %172 {offsets = [0, 2], sizes = [8, 1], strides = [1, 1]} : vector<8x128xf32> to vector<8x1xf32>
    %189 = arith.maximumf %187, %188 : vector<8x1xf32>
    %190 = arith.cmpf oge, %186, %189 : vector<8x1xf32>
    %cst_57 = arith.constant dense<true> : vector<8x1xi1>
    %191 = arith.xori %190, %cst_57 : vector<8x1xi1>
    %192 = arith.cmpf oge, %187, %188 : vector<8x1xf32>
    %193 = arith.andi %191, %192 : vector<8x1xi1>
    %cst_58 = arith.constant dense<true> : vector<8x1xi1>
    %194 = arith.xori %190, %cst_58 : vector<8x1xi1>
    %cst_59 = arith.constant dense<true> : vector<8x1xi1>
    %195 = arith.xori %193, %cst_59 : vector<8x1xi1>
    %196 = arith.andi %194, %195 : vector<8x1xi1>
    %197 = vector.broadcast %190 : vector<8x1xi1> to vector<8x128xi1>
    %198 = arith.andi %197, %145 : vector<8x128xi1>
    %199 = vector.broadcast %193 : vector<8x1xi1> to vector<8x128xi1>
    %200 = arith.andi %199, %150 : vector<8x128xi1>
    %201 = arith.ori %198, %200 : vector<8x128xi1>
    %202 = vector.broadcast %196 : vector<8x1xi1> to vector<8x128xi1>
    %203 = arith.andi %202, %155 : vector<8x128xi1>
    %204 = arith.ori %201, %203 : vector<8x128xi1>
    %205 = arith.negf %172 : vector<8x128xf32>
    %206 = math.exp %205 : vector<8x128xf32>
    %cst_60 = arith.constant 1.000000e+00 : f32
    %207 = vector.broadcast %cst_60 : f32 to vector<8x128xf32>
    %208 = arith.addf %207, %206 : vector<8x128xf32>
    %209 = arith.divf %207, %208 : vector<8x128xf32>
    %cst_61 = arith.constant 0.000000e+00 : f32
    %210 = vector.broadcast %cst_61 : f32 to vector<8x128xf32>
    %211 = arith.select %204, %209, %210 : vector<8x128xi1>, vector<8x128xf32>
    %cst_62 = arith.constant 0.000000e+00 : f32
    %212 = vector.broadcast %cst_62 : f32 to vector<8x128xf32>
    %213 = arith.select %133, %172, %212 : vector<8x128xi1>, vector<8x128xf32>
    %214 = arith.addf %213, %185 : vector<8x128xf32>
    %215 = arith.addf %214, %211 : vector<8x128xf32>
    %c0_63 = arith.constant 0 : index
    %c0_64 = arith.constant 0 : index
    %216 = vector.load %arg9[%c0_63, %c0_64] : memref<8x128xf32, #tpu.memory_space<vmem>>, vector<8x128xf32>
    tpu.vector_store %arg9[%c0_63, %c0_64], %215 {strides = array<i32>} : memref<8x128xf32, #tpu.memory_space<vmem>>, vector<8x128xf32>,
    return
  }
}

</mosaic_0001>

<llo_original>
// kernel: tpu_custom_call.1
$region0: #{tpu_custom_call.1}
  #allocation0 [shape = 'u32[]', space=smem, size = 0x4, offset = 0x4, fixed_abs, tag = 'smem constant byte address 0x4 - core index']
  #allocation1 [shape = 'u32[144,128]{1,0:T(1,128)}', space=vmem, size = 0x12000, scoped, tag = 'internal scratch']
  %s0 = inlined_call_operand.vmem [shape: f32[32,32], index: 0, kind: input, shape index: {}]
  %s1 = inlined_call_operand.hbm [shape: f32[32,32], index: 1, kind: input, shape index: {}]
  %s2 = inlined_call_operand.vmem [shape: f32[24,32], index: 2, kind: input, shape index: {}]
  %s3 = inlined_call_operand.hbm [shape: f32[32,384], index: 3, kind: input, shape index: {}]
  %s4 = inlined_call_operand.vmem [shape: f32[128,32], index: 4, kind: input, shape index: {}]
  %s5 = inlined_call_operand.hbm [shape: f32[16,128], index: 5, kind: input, shape index: {}]
  %s6 = inlined_call_operand.hbm [shape: bf16[96,1024], index: 6, kind: input, shape index: {}]
  %s7 = inlined_call_operand.hbm [shape: f32[1,1024], index: 7, kind: input, shape index: {}]
  %s8 = inlined_call_operand.vmem [shape: bf16[256,128], index: 8, kind: input, shape index: {}]
  %s9 = inlined_call_operand.hbm [shape: f32[8,128], index: 9, kind: output, shape index: {}]
  %s10 = sld [smem:[#allocation0]]
  $region66: #{tpu_custom_call.1} parent=0
    _
  %s12 = ssub.s32 1, %s10
  %s13 = scalar_select 0, %s12, %s10
  $region1: #{tpu_custom_call.1} parent=0
    #allocation2 [shape = 'u8[16384]{0}', space=vmem, size = 0x4000, scoped, tag = 'input window, operand 1, single buffered']
    #allocation3 [shape = 's32[1]{0}', space=sflag, size = 0x4, scoped, tag = 'scoped memory for tpu_custom_call.1']
    #allocation4 [shape = 's32[1]{0}', space=sflag, size = 0x4, scoped, tag = 'scoped memory for tpu_custom_call.1']
    #allocation5 [shape = 'u8[49152]{0}', space=vmem, size = 0xc000, scoped, tag = 'input window, operand 3, single buffered']
    #allocation6 [shape = 's32[1]{0}', space=sflag, size = 0x4, scoped, tag = 'scoped memory for tpu_custom_call.1']
    #allocation7 [shape = 'u8[8192]{0}', space=vmem, size = 0x2000, scoped, tag = 'input window, operand 5, single buffered']
    #allocation8 [shape = 'u8[196608]{0}', space=vmem, size = 0x30000, scoped, tag = 'input window, operand 6, single buffered']
    #allocation9 [shape = 's32[1]{0}', space=sflag, size = 0x4, scoped, tag = 'scoped memory for tpu_custom_call.1']
    #allocation10 [shape = 'u8[4096]{0}', space=vmem, size = 0x1000, scoped, tag = 'input window, operand 7, single buffered']
    #allocation11 [shape = 'u8[4096]{0}', space=vmem, size = 0x1000, scoped, tag = 'output window, operand 0, single buffered']
    %14 = vsyncpa [#allocation3], 0
    %15 = vsyncpa [#allocation6], 0
    %16 = vsyncpa [#allocation9], 0
    %17 = vsyncpa [#allocation4], 0
    // Predicated region
    $region2: #{tpu_custom_call.1} parent=1 // pred_check
      _
    $region3: #{tpu_custom_call.1} parent=1 // pred_check_branch
      %19 = sbr.rel (0) target = $region5
    $region4: #{tpu_custom_call.1} parent=1 // pred_region
      _
    $region5: #{tpu_custom_call.1} parent=1 // pred_fallthru
      _
    // Predicated region
    $region6: #{tpu_custom_call.1} parent=1 // pred_check
      _
    $region7: #{tpu_custom_call.1} parent=1 // pred_check_branch
      %21 = sbr.rel (0) target = $region9
    $region8: #{tpu_custom_call.1} parent=1 // pred_region
      %s23 = ssub.s32 512, 512
      %24 = vsyncadd [#allocation3], %s23
      %s25 = sshll.u32 [#allocation2], 4
      %s26 = int_to_ptr.vmem [resolvable:$true] %s25
      %31 = dma.hbm_to_vmem [thread:$0]  %s1, 512, %s26, [#allocation3], 128, 128, 8
    $region9: #{tpu_custom_call.1} parent=1 // pred_fallthru
      _
    // Predicated region
    $region10: #{tpu_custom_call.1} parent=1 // pred_check
      _
    $region11: #{tpu_custom_call.1} parent=1 // pred_check_branch
      %33 = sbr.rel (0) target = $region13
    $region12: #{tpu_custom_call.1} parent=1 // pred_region
      _
    $region13: #{tpu_custom_call.1} parent=1 // pred_fallthru
      _
    // Predicated region
    $region14: #{tpu_custom_call.1} parent=1 // pred_check
      _
    $region15: #{tpu_custom_call.1} parent=1 // pred_check_branch
      %35 = sbr.rel (0) target = $region17
    $region16: #{tpu_custom_call.1} parent=1 // pred_region
      %s37 = ssub.s32 1536, 1536
      %38 = vsyncadd [#allocation6], %s37
      %s39 = sshll.u32 [#allocation5], 4
      %s40 = int_to_ptr.vmem [resolvable:$true] %s39
      %45 = dma.hbm_to_vmem [thread:$0]  %s3, 1536, %s40, [#allocation6], 384, 384, 24
    $region17: #{tpu_custom_call.1} parent=1 // pred_fallthru
      _
    // Predicated region
    $region18: #{tpu_custom_call.1} parent=1 // pred_check
      _
    $region19: #{tpu_custom_call.1} parent=1 // pred_check_branch
      %47 = sbr.rel (0) target = $region21
    $region20: #{tpu_custom_call.1} parent=1 // pred_region
      _
    $region21: #{tpu_custom_call.1} parent=1 // pred_fallthru
      _
    // Predicated region
    $region22: #{tpu_custom_call.1} parent=1 // pred_check
      _
    $region23: #{tpu_custom_call.1} parent=1 // pred_check_branch
      %49 = sbr.rel (0) target = $region25
    $region24: #{tpu_custom_call.1} parent=1 // pred_region
      %s51 = ssub.s32 256, 256
      %52 = vsyncadd [#allocation6], %s51
      %s53 = sshll.u32 [#allocation7], 4
      %s54 = int_to_ptr.vmem [resolvable:$true] %s53
      %59 = dma.hbm_to_vmem [thread:$0]  %s5, 256, %s54, [#allocation6], 128, 128, 8
    $region25: #{tpu_custom_call.1} parent=1 // pred_fallthru
      _
    // Predicated region
    $region26: #{tpu_custom_call.1} parent=1 // pred_check
      _
    $region27: #{tpu_custom_call.1} parent=1 // pred_check_branch
      %61 = sbr.rel (0) target = $region29
    $region28: #{tpu_custom_call.1} parent=1 // pred_region
      %s63 = ssub.s32 6144, 6144
      %64 = vsyncadd [#allocation9], %s63
      %s65 = sshll.u32 [#allocation8], 4
      %s66 = int_to_ptr.vmem [resolvable:$true] %s65
      %71 = dma.hbm_to_vmem [thread:$0]  %s6, 6144, %s66, [#allocation9], 512, 512, 32
    $region29: #{tpu_custom_call.1} parent=1 // pred_fallthru
      _
    // Predicated region
    $region30: #{tpu_custom_call.1} parent=1 // pred_check
      _
    $region31: #{tpu_custom_call.1} parent=1 // pred_check_branch
      %73 = sbr.rel (0) target = $region33
    $region32: #{tpu_custom_call.1} parent=1 // pred_region
      %s75 = ssub.s32 128, 128
      %76 = vsyncadd [#allocation9], %s75
      %s78 = sshll.u32 [#allocation10], 4
      %s79 = int_to_ptr.vmem [resolvable:$true] %s78
      %81 = dma.hbm_to_vmem [thread:$0]  %s7, 128, %s79, [#allocation9]
    $region33: #{tpu_custom_call.1} parent=1 // pred_fallthru
      _
    // Predicated region
    $region34: #{tpu_custom_call.1} parent=1 // pred_check
      _
    $region35: #{tpu_custom_call.1} parent=1 // pred_check_branch
      %83 = sbr.rel (0) target = $region37
    $region36: #{tpu_custom_call.1} parent=1 // pred_region
      _
    $region37: #{tpu_custom_call.1} parent=1 // pred_fallthru
      _
    // Predicated region
    $region38: #{tpu_custom_call.1} parent=1 // pred_check
      _
    $region39: #{tpu_custom_call.1} parent=1 // pred_check_branch
      %85 = sbr.rel (0) target = $region41
    $region40: #{tpu_custom_call.1} parent=1 // pred_region
      %86 = dma.done [#allocation3], 512
    $region41: #{tpu_custom_call.1} parent=1 // pred_fallthru
      _
    // Predicated region
    $region42: #{tpu_custom_call.1} parent=1 // pred_check
      _
    $region43: #{tpu_custom_call.1} parent=1 // pred_check_branch
      %88 = sbr.rel (0) target = $region45
    $region44: #{tpu_custom_call.1} parent=1 // pred_region
      %89 = dma.done [#allocation6], 1536
    $region45: #{tpu_custom_call.1} parent=1 // pred_fallthru
      _
    // Predicated region
    $region46: #{tpu_custom_call.1} parent=1 // pred_check
      _
    $region47: #{tpu_custom_call.1} parent=1 // pred_check_branch
      %91 = sbr.rel (0) target = $region49
    $region48: #{tpu_custom_call.1} parent=1 // pred_region
      %92 = dma.done [#allocation6], 256
    $region49: #{tpu_custom_call.1} parent=1 // pred_fallthru
      _
    // Predicated region
    $region50: #{tpu_custom_call.1} parent=1 // pred_check
      _
    $region51: #{tpu_custom_call.1} parent=1 // pred_check_branch
      %94 = sbr.rel (0) target = $region53
    $region52: #{tpu_custom_call.1} parent=1 // pred_region
      %95 = dma.done [#allocation9], 6144
    $region53: #{tpu_custom_call.1} parent=1 // pred_fallthru
      _
    // Predicated region
    $region54: #{tpu_custom_call.1} parent=1 // pred_check
      _
    $region55: #{tpu_custom_call.1} parent=1 // pred_check_branch
      %97 = sbr.rel (0) target = $region57
    $region56: #{tpu_custom_call.1} parent=1 // pred_region
      %98 = dma.done [#allocation9], 128
    $region57: #{tpu_custom_call.1} parent=1 // pred_fallthru
      _
    %v100 = vld [vmem:[%s0] sm:$0xff]
    %v101 = vld [vmem:[%s0 + $0x8] sm:$0xff]
    %v102 = vld [vmem:[%s0 + $0x10] sm:$0xff]
    %v103 = vld [vmem:[%s0 + $0x18] sm:$0xff]
    %v104 = vld [vmem:[#allocation5] sm:$0xff]
    %v105 = vld [vmem:[#allocation5 + $0x8] sm:$0xff]
    %v106 = vld [vmem:[#allocation5 + $0x10] sm:$0xff]
    %v107 = vld [vmem:[#allocation5 + $0x18] sm:$0xff]
    %v108 = vld [vmem:[#allocation5 + $0x20] sm:$0xff]
    %v109 = vld [vmem:[#allocation5 + $0x28] sm:$0xff]
    %v110 = vld [vmem:[#allocation5 + $0x30] sm:$0xff]
    %v111 = vld [vmem:[#allocation5 + $0x38] sm:$0xff]
    %v112 = vld [vmem:[#allocation5 + $0x40] sm:$0xff]
    %v113 = vld [vmem:[#allocation5 + $0x48] sm:$0xff]
    %v114 = vld [vmem:[#allocation5 + $0x50] sm:$0xff]
    %v115 = vld [vmem:[#allocation5 + $0x58] sm:$0xff]
    %v116 = vld [vmem:[#allocation7] sm:$0xff]
    %v117 = vld [vmem:[#allocation7 + $0x8] sm:$0xff]
    %v118 = vlaneseq
    %v119 = vshrl.u32 %v118, 7
    %v120 = vsub.s32 0, %v119
    %v121 = vrot.slane %v116, %v120
    %vm122 = vcmask 261120
    %v124 = vsel %vm122, %v100, 0
    %v127 = vsel %vm122, %v101, 0
    %v130 = vsel %vm122, %v102, 0
    %v133 = vsel %vm122, %v103, 0
    %135 = vmatprep.subr.mxu0 0.0
    %136 = vmatpush1.msra.mxu0 %v104
    %137 = vmatprep.subr.mxu0 0.0
    %138 = vmatpush1.msra.mxu0 %v107
    %139 = vmatprep.subr.mxu0 0.0
    %140 = vmatpush1.msra.mxu0 %v110
    %141 = vmatprep.subr.mxu0 0.0
    %142 = vmatpush1.msra.mxu0 %v113
    %143 = vmatprep.subr.mxu0 0.0
    %144 = vmatpush1.msra.mxu0 0.0
    %145 = vmatprep.subr.mxu0 0.0
    %146 = vmatpush1.msra.mxu0 0.0
    %147 = vmatprep.subr.mxu0 0.0
    %148 = vmatpush1.msra.mxu0 0.0
    %149 = vmatprep.subr.mxu0 0.0
    %150 = vmatpush1.msra.mxu0 0.0
    %151 = vmatprep.subr.mxu0 0.0
    %152 = vmatpush1.msra.mxu0 0.0
    %153 = vmatprep.subr.mxu0 0.0
    %154 = vmatpush1.msra.mxu0 0.0
    %155 = vmatprep.subr.mxu0 0.0
    %156 = vmatpush1.msra.mxu0 0.0
    %157 = vmatprep.subr.mxu0 0.0
    %158 = vmatpush1.msra.mxu0 0.0
    %159 = vmatprep.subr.mxu0 0.0
    %160 = vmatpush1.msra.mxu0 0.0
    %161 = vmatprep.subr.mxu0 0.0
    %162 = vmatpush1.msra.mxu0 0.0
    %163 = vmatprep.subr.mxu0 0.0
    %164 = vmatpush1.msra.mxu0 0.0
    %165 = vmatprep.subr.mxu0 0.0
    %166 = vmatpush1.msra.mxu0 0.0
    %167 = vmatprep.subr.mxu0 0.0
    %168 = vmatpush1.msra.mxu0 0.0
    %169 = vmatprep.subr.mxu0 0.0
    %170 = vmatpush1.msra.mxu0 0.0
    %171 = vmatprep.subr.mxu0 0.0
    %172 = vmatpush1.msra.mxu0 0.0
    %173 = vmatprep.subr.mxu0 0.0
    %174 = vmatpush1.msra.mxu0 0.0
    %175 = vmatprep.subr.mxu0 0.0
    %176 = vmatpush1.msra.mxu0 0.0
    %177 = vmatprep.subr.mxu0 0.0
    %178 = vmatpush1.msra.mxu0 0.0
    %179 = vmatprep.subr.mxu0 0.0
    %180 = vmatpush1.msra.mxu0 0.0
    %181 = vmatprep.subr.mxu0 0.0
    %182 = vmatpush1.msra.mxu0 0.0
    %183 = vmatprep.subr.mxu0 0.0
    %184 = vmatpush1.msra.mxu0 0.0
    %185 = vmatprep.subr.mxu0 0.0
    %186 = vmatpush1.msra.mxu0 0.0
    %187 = vmatprep.subr.mxu0 0.0
    %188 = vmatpush1.msra.mxu0 0.0
    %189 = vmatprep.subr.mxu0 0.0
    %190 = vmatpush1.msra.mxu0 0.0
    %191 = vmatprep.subr.mxu0 0.0
    %192 = vmatpush1.msra.mxu0 0.0
    %193 = vmatprep.subr.mxu0 0.0
    %194 = vmatpush1.msra.mxu0 0.0
    %195 = vmatprep.subr.mxu0 0.0
    %196 = vmatpush1.msra.mxu0 0.0
    %197 = vmatprep.subr.mxu0 0.0
    %198 = vmatpush1.msra.mxu0 0.0
    %199 = vmatprep.mubr.f32.mxu0 0.0
    %200 = vmatmul.mubr.f32.gmra.mrb[0].mxu0 %v124
    %v201 = vpop.f32.mrb[0].mxu0
    %v202 = vadd.f32 %v121, %v201
    %v203 = vpop.f32.mrb[0].mxu0
    %204 = vmatprep.mubr.f32.mxu0 0.0
    %205 = vmatmul.mubr.f32.gmra.mrb[0].mxu0 %v127
    %v206 = vpop.f32.mrb[0].mxu0
    %v207 = vadd.f32 %v121, %v206
    %v208 = vpop.f32.mrb[0].mxu0
    %209 = vmatprep.mubr.f32.mxu0 0.0
    %210 = vmatmul.mubr.f32.gmra.mrb[0].mxu0 %v130
    %v211 = vpop.f32.mrb[0].mxu0
    %v212 = vadd.f32 %v121, %v211
    %v213 = vpop.f32.mrb[0].mxu0
    %214 = vmatprep.mubr.f32.mxu0 0.0
    %215 = vmatmul.mubr.f32.gmra.mrb[0].mxu0 %v133
    %v216 = vpop.f32.mrb[0].mxu0
    %v217 = vadd.f32 %v121, %v216
    %v218 = vpop.f32.mrb[0].mxu0
    %219 = vdwg.mxu0
    %224 = vrot.lane.b32.xlu0 %v202, 96
    %v225 = vpop.permute.xlu0 %224
    %226 = vrot.lane.b32.xlu0 %v207, 96
    %v227 = vpop.permute.xlu0 %226
    %228 = vrot.lane.b32.xlu0 %v212, 96
    %v229 = vpop.permute.xlu0 %228
    %230 = vrot.lane.b32.xlu0 %v217, 96
    %v231 = vpop.permute.xlu0 %230
    %v232 = vsel %vm122, %v202, 0
    %v234 = vsel %vm122, %v207, 0
    %v236 = vsel %vm122, %v212, 0
    %v238 = vsel %vm122, %v217, 0
    %v240 = vsel %vm122, %v225, 0
    %v242 = vsel %vm122, %v227, 0
    %v244 = vsel %vm122, %v229, 0
    %v246 = vsel %vm122, %v231, 0
    %248 = vmatprep.subr.mxu0 0.0
    %249 = vmatpush1.xpose.msra.mxu0 %v240
    %250 = vmatprep.subr.mxu0 0.0
    %251 = vmatpush1.xpose.msra.mxu0 %v242
    %252 = vmatprep.subr.mxu0 0.0
    %253 = vmatpush1.xpose.msra.mxu0 %v244
    %254 = vmatprep.subr.mxu0 0.0
    %255 = vmatpush1.xpose.msra.mxu0 %v246
    %256 = vmatprep.subr.mxu0 0.0
    %257 = vmatpush1.xpose.msra.mxu0 0.0
    %258 = vmatprep.subr.mxu0 0.0
    %259 = vmatpush1.xpose.msra.mxu0 0.0
    %260 = vmatprep.subr.mxu0 0.0
    %261 = vmatpush1.xpose.msra.mxu0 0.0
    %262 = vmatprep.subr.mxu0 0.0
    %263 = vmatpush1.xpose.msra.mxu0 0.0
    %264 = vmatprep.subr.mxu0 0.0
    %265 = vmatpush1.xpose.msra.mxu0 0.0
    %266 = vmatprep.subr.mxu0 0.0
    %267 = vmatpush1.xpose.msra.mxu0 0.0
    %268 = vmatprep.subr.mxu0 0.0
    %269 = vmatpush1.xpose.msra.mxu0 0.0
    %270 = vmatprep.subr.mxu0 0.0
    %271 = vmatpush1.xpose.msra.mxu0 0.0
    %272 = vmatprep.subr.mxu0 0.0
    %273 = vmatpush1.xpose.msra.mxu0 0.0
    %274 = vmatprep.subr.mxu0 0.0
    %275 = vmatpush1.xpose.msra.mxu0 0.0
    %276 = vmatprep.subr.mxu0 0.0
    %277 = vmatpush1.xpose.msra.mxu0 0.0
    %278 = vmatprep.subr.mxu0 0.0
    %279 = vmatpush1.xpose.msra.mxu0 0.0
    %280 = vmatprep.subr.mxu0 0.0
    %281 = vmatpush1.xpose.msra.mxu0 0.0
    %282 = vmatprep.subr.mxu0 0.0
    %283 = vmatpush1.xpose.msra.mxu0 0.0
    %284 = vmatprep.subr.mxu0 0.0
    %285 = vmatpush1.xpose.msra.mxu0 0.0
    %286 = vmatprep.subr.mxu0 0.0
    %287 = vmatpush1.xpose.msra.mxu0 0.0
    %288 = vmatprep.subr.mxu0 0.0
    %289 = vmatpush1.xpose.msra.mxu0 0.0
    %290 = vmatprep.subr.mxu0 0.0
    %291 = vmatpush1.xpose.msra.mxu0 0.0
    %292 = vmatprep.subr.mxu0 0.0
    %293 = vmatpush1.xpose.msra.mxu0 0.0
    %294 = vmatprep.subr.mxu0 0.0
    %295 = vmatpush1.xpose.msra.mxu0 0.0
    %296 = vmatprep.subr.mxu0 0.0
    %297 = vmatpush1.xpose.msra.mxu0 0.0
    %298 = vmatprep.subr.mxu0 0.0
    %299 = vmatpush1.xpose.msra.mxu0 0.0
    %300 = vmatprep.subr.mxu0 0.0
    %301 = vmatpush1.xpose.msra.mxu0 0.0
    %302 = vmatprep.subr.mxu0 0.0
    %303 = vmatpush1.xpose.msra.mxu0 0.0
    %304 = vmatprep.subr.mxu0 0.0
    %305 = vmatpush1.xpose.msra.mxu0 0.0
    %306 = vmatprep.subr.mxu0 0.0
    %307 = vmatpush1.xpose.msra.mxu0 0.0
    %308 = vmatprep.subr.mxu0 0.0
    %309 = vmatpush1.xpose.msra.mxu0 0.0
    %310 = vmatprep.subr.mxu0 0.0
    %311 = vmatpush1.xpose.msra.mxu0 0.0
    %312 = vmatprep.mubr.f32.mxu0 0.0
    %313 = vmatmul.mubr.f32.gmra.mrb[0].mxu0 %v232
    %v314 = vpop.f32.mrb[0].mxu0
    %v315 = vadd.f32 0.0, %v314
    %v316 = vpop.f32.mrb[0].mxu0
    %317 = vmatprep.mubr.f32.mxu0 0.0
    %318 = vmatmul.mubr.f32.gmra.mrb[0].mxu0 %v234
    %v319 = vpop.f32.mrb[0].mxu0
    %v320 = vadd.f32 0.0, %v319
    %v321 = vpop.f32.mrb[0].mxu0
    %322 = vmatprep.mubr.f32.mxu0 0.0
    %323 = vmatmul.mubr.f32.gmra.mrb[0].mxu0 %v236
    %v324 = vpop.f32.mrb[0].mxu0
    %v325 = vadd.f32 0.0, %v324
    %v326 = vpop.f32.mrb[0].mxu0
    %327 = vmatprep.mubr.f32.mxu0 0.0
    %328 = vmatmul.mubr.f32.gmra.mrb[0].mxu0 %v238
    %v329 = vpop.f32.mrb[0].mxu0
    %v330 = vadd.f32 0.0, %v329
    %v331 = vpop.f32.mrb[0].mxu0
    %332 = vdwg.mxu0
    %v333 = vmul.f32 %v315, 0.17677669
    %v334 = vmul.f32 %v320, 0.17677669
    %v335 = vmul.f32 %v325, 0.17677669
    %v336 = vmul.f32 %v330, 0.17677669
    %v337 = vld [vmem:[#allocation2] sm:$0xff]
    %v338 = vld [vmem:[#allocation2 + $0x8] sm:$0xff]
    %v339 = vld [vmem:[#allocation2 + $0x10] sm:$0xff]
    %v340 = vld [vmem:[#allocation2 + $0x18] sm:$0xff]
    %v341 = vadd.f32 %v333, %v337
    %v342 = vadd.f32 %v334, %v338
    %v343 = vadd.f32 %v335, %v339
    %v344 = vadd.f32 %v336, %v340
    %v345 = vsel %vm122, %v341, -inf
    %346 = vmax.xlane.f32.xlu0 %v345
    %v347 = vpop.xlane.xlu0 %346
    %v348 = vsel %vm122, %v342, -inf
    %349 = vmax.xlane.f32.xlu0 %v348
    %v350 = vpop.xlane.xlu0 %349
    %v351 = vsel %vm122, %v343, -inf
    %352 = vmax.xlane.f32.xlu0 %v351
    %v353 = vpop.xlane.xlu0 %352
    %v354 = vsel %vm122, %v344, -inf
    %355 = vmax.xlane.f32.xlu0 %v354
    %v356 = vpop.xlane.xlu0 %355
    %v357 = vsub.f32 %v341, %v347
    %v358 = vsub.f32 %v342, %v350
    %v359 = vsub.f32 %v343, %v353
    %v360 = vsub.f32 %v344, %v356
    %v361 = vmul.f32 %v357, 1.442695
    %v362 = vpow.pop %v361
    %v363 = vmul.f32 %v358, 1.442695
    %v364 = vpow.pop %v363
    %v365 = vmul.f32 %v359, 1.442695
    %v366 = vpow.pop %v365
    %v367 = vmul.f32 %v360, 1.442695
    %v368 = vpow.pop %v367
    %v369 = vsel %vm122, %v362, 0.0
    %370 = vadd.xlane.f32.xlu0 %v369
    %v371 = vpop.xlane.xlu0 %370
    %v372 = vsel %vm122, %v364, 0.0
    %373 = vadd.xlane.f32.xlu0 %v372
    %v374 = vpop.xlane.xlu0 %373
    %v375 = vsel %vm122, %v366, 0.0
    %376 = vadd.xlane.f32.xlu0 %v375
    %v377 = vpop.xlane.xlu0 %376
    %v378 = vsel %vm122, %v368, 0.0
    %379 = vadd.xlane.f32.xlu0 %v378
    %v380 = vpop.xlane.xlu0 %379
    %v381 = vrcp.pop %v371
    %v382 = vrcp.pop %v374
    %v383 = vrcp.pop %v377
    %v384 = vrcp.pop %v380
    %v385 = vmul.f32 %v362, %v381
    %v386 = vmul.f32 %v364, %v382
    %v387 = vmul.f32 %v366, %v383
    %v388 = vmul.f32 %v368, %v384
    %389 = vrot.lane.b32.xlu0 %v202, 64
    %v390 = vpop.permute.xlu0 %389
    %391 = vrot.lane.b32.xlu0 %v207, 64
    %v392 = vpop.permute.xlu0 %391
    %393 = vrot.lane.b32.xlu0 %v212, 64
    %v394 = vpop.permute.xlu0 %393
    %395 = vrot.lane.b32.xlu0 %v217, 64
    %v396 = vpop.permute.xlu0 %395
    %v402 = vsel %vm122, %v385, 0
    %v405 = vsel %vm122, %v386, 0
    %v408 = vsel %vm122, %v387, 0
    %v411 = vsel %vm122, %v388, 0
    %413 = vmatprep.subr.mxu0 0.0
    %414 = vmatpush1.msra.mxu0 %v390
    %415 = vmatprep.subr.mxu0 0.0
    %416 = vmatpush1.msra.mxu0 %v392
    %417 = vmatprep.subr.mxu0 0.0
    %418 = vmatpush1.msra.mxu0 %v394
    %419 = vmatprep.subr.mxu0 0.0
    %420 = vmatpush1.msra.mxu0 %v396
    %421 = vmatprep.subr.mxu0 0.0
    %422 = vmatpush1.msra.mxu0 0.0
    %423 = vmatprep.subr.mxu0 0.0
    %424 = vmatpush1.msra.mxu0 0.0
    %425 = vmatprep.subr.mxu0 0.0
    %426 = vmatpush1.msra.mxu0 0.0
    %427 = vmatprep.subr.mxu0 0.0
    %428 = vmatpush1.msra.mxu0 0.0
    %429 = vmatprep.subr.mxu0 0.0
    %430 = vmatpush1.msra.mxu0 0.0
    %431 = vmatprep.subr.mxu0 0.0
    %432 = vmatpush1.msra.mxu0 0.0
    %433 = vmatprep.subr.mxu0 0.0
    %434 = vmatpush1.msra.mxu0 0.0
    %435 = vmatprep.subr.mxu0 0.0
    %436 = vmatpush1.msra.mxu0 0.0
    %437 = vmatprep.subr.mxu0 0.0
    %438 = vmatpush1.msra.mxu0 0.0
    %439 = vmatprep.subr.mxu0 0.0
    %440 = vmatpush1.msra.mxu0 0.0
    %441 = vmatprep.subr.mxu0 0.0
    %442 = vmatpush1.msra.mxu0 0.0
    %443 = vmatprep.subr.mxu0 0.0
    %444 = vmatpush1.msra.mxu0 0.0
    %445 = vmatprep.subr.mxu0 0.0
    %446 = vmatpush1.msra.mxu0 0.0
    %447 = vmatprep.subr.mxu0 0.0
    %448 = vmatpush1.msra.mxu0 0.0
    %449 = vmatprep.subr.mxu0 0.0
    %450 = vmatpush1.msra.mxu0 0.0
    %451 = vmatprep.subr.mxu0 0.0
    %452 = vmatpush1.msra.mxu0 0.0
    %453 = vmatprep.subr.mxu0 0.0
    %454 = vmatpush1.msra.mxu0 0.0
    %455 = vmatprep.subr.mxu0 0.0
    %456 = vmatpush1.msra.mxu0 0.0
    %457 = vmatprep.subr.mxu0 0.0
    %458 = vmatpush1.msra.mxu0 0.0
    %459 = vmatprep.subr.mxu0 0.0
    %460 = vmatpush1.msra.mxu0 0.0
    %461 = vmatprep.subr.mxu0 0.0
    %462 = vmatpush1.msra.mxu0 0.0
    %463 = vmatprep.subr.mxu0 0.0
    %464 = vmatpush1.msra.mxu0 0.0
    %465 = vmatprep.subr.mxu0 0.0
    %466 = vmatpush1.msra.mxu0 0.0
    %467 = vmatprep.subr.mxu0 0.0
    %468 = vmatpush1.msra.mxu0 0.0
    %469 = vmatprep.subr.mxu0 0.0
    %470 = vmatpush1.msra.mxu0 0.0
    %471 = vmatprep.subr.mxu0 0.0
    %472 = vmatpush1.msra.mxu0 0.0
    %473 = vmatprep.subr.mxu0 0.0
    %474 = vmatpush1.msra.mxu0 0.0
    %475 = vmatprep.subr.mxu0 0.0
    %476 = vmatpush1.msra.mxu0 0.0
    %477 = vmatprep.mubr.f32.mxu0 0.0
    %478 = vmatmul.mubr.f32.gmra.mrb[0].mxu0 %v402
    %v479 = vpop.f32.mrb[0].mxu0
    %v480 = vadd.f32 0.0, %v479
    %v481 = vpop.f32.mrb[0].mxu0
    %482 = vmatprep.mubr.f32.mxu0 0.0
    %483 = vmatmul.mubr.f32.gmra.mrb[0].mxu0 %v405
    %v484 = vpop.f32.mrb[0].mxu0
    %v485 = vadd.f32 0.0, %v484
    %v486 = vpop.f32.mrb[0].mxu0
    %487 = vmatprep.mubr.f32.mxu0 0.0
    %488 = vmatmul.mubr.f32.gmra.mrb[0].mxu0 %v408
    %v489 = vpop.f32.mrb[0].mxu0
    %v490 = vadd.f32 0.0, %v489
    %v491 = vpop.f32.mrb[0].mxu0
    %492 = vmatprep.mubr.f32.mxu0 0.0
    %493 = vmatmul.mubr.f32.gmra.mrb[0].mxu0 %v411
    %v494 = vpop.f32.mrb[0].mxu0
    %v495 = vadd.f32 0.0, %v494
    %v496 = vpop.f32.mrb[0].mxu0
    %497 = vdwg.mxu0
    %v498 = vlaneseq
    %v499 = vshrl.u32 %v498, 7
    %v500 = vsub.s32 1, %v499
    %v501 = vrot.slane %v116, %v500
    %v503 = vsel %vm122, %v480, 0
    %v506 = vsel %vm122, %v485, 0
    %v509 = vsel %vm122, %v490, 0
    %v512 = vsel %vm122, %v495, 0
    %514 = vmatprep.subr.mxu0 0.0
    %515 = vmatpush1.msra.mxu0 %v106
    %516 = vmatprep.subr.mxu0 0.0
    %517 = vmatpush1.msra.mxu0 %v109
    %518 = vmatprep.subr.mxu0 0.0
    %519 = vmatpush1.msra.mxu0 %v112
    %520 = vmatprep.subr.mxu0 0.0
    %521 = vmatpush1.msra.mxu0 %v115
    %522 = vmatprep.subr.mxu0 0.0
    %523 = vmatpush1.msra.mxu0 0.0
    %524 = vmatprep.subr.mxu0 0.0
    %525 = vmatpush1.msra.mxu0 0.0
    %526 = vmatprep.subr.mxu0 0.0
    %527 = vmatpush1.msra.mxu0 0.0
    %528 = vmatprep.subr.mxu0 0.0
    %529 = vmatpush1.msra.mxu0 0.0
    %530 = vmatprep.subr.mxu0 0.0
    %531 = vmatpush1.msra.mxu0 0.0
    %532 = vmatprep.subr.mxu0 0.0
    %533 = vmatpush1.msra.mxu0 0.0
    %534 = vmatprep.subr.mxu0 0.0
    %535 = vmatpush1.msra.mxu0 0.0
    %536 = vmatprep.subr.mxu0 0.0
    %537 = vmatpush1.msra.mxu0 0.0
    %538 = vmatprep.subr.mxu0 0.0
    %539 = vmatpush1.msra.mxu0 0.0
    %540 = vmatprep.subr.mxu0 0.0
    %541 = vmatpush1.msra.mxu0 0.0
    %542 = vmatprep.subr.mxu0 0.0
    %543 = vmatpush1.msra.mxu0 0.0
    %544 = vmatprep.subr.mxu0 0.0
    %545 = vmatpush1.msra.mxu0 0.0
    %546 = vmatprep.subr.mxu0 0.0
    %547 = vmatpush1.msra.mxu0 0.0
    %548 = vmatprep.subr.mxu0 0.0
    %549 = vmatpush1.msra.mxu0 0.0
    %550 = vmatprep.subr.mxu0 0.0
    %551 = vmatpush1.msra.mxu0 0.0
    %552 = vmatprep.subr.mxu0 0.0
    %553 = vmatpush1.msra.mxu0 0.0
    %554 = vmatprep.subr.mxu0 0.0
    %555 = vmatpush1.msra.mxu0 0.0
    %556 = vmatprep.subr.mxu0 0.0
    %557 = vmatpush1.msra.mxu0 0.0
    %558 = vmatprep.subr.mxu0 0.0
    %559 = vmatpush1.msra.mxu0 0.0
    %560 = vmatprep.subr.mxu0 0.0
    %561 = vmatpush1.msra.mxu0 0.0
    %562 = vmatprep.subr.mxu0 0.0
    %563 = vmatpush1.msra.mxu0 0.0
    %564 = vmatprep.subr.mxu0 0.0
    %565 = vmatpush1.msra.mxu0 0.0
    %566 = vmatprep.subr.mxu0 0.0
    %567 = vmatpush1.msra.mxu0 0.0
    %568 = vmatprep.subr.mxu0 0.0
    %569 = vmatpush1.msra.mxu0 0.0
    %570 = vmatprep.subr.mxu0 0.0
    %571 = vmatpush1.msra.mxu0 0.0
    %572 = vmatprep.subr.mxu0 0.0
    %573 = vmatpush1.msra.mxu0 0.0
    %574 = vmatprep.subr.mxu0 0.0
    %575 = vmatpush1.msra.mxu0 0.0
    %576 = vmatprep.subr.mxu0 0.0
    %577 = vmatpush1.msra.mxu0 0.0
    %578 = vmatprep.mubr.f32.mxu0 0.0
    %579 = vmatmul.mubr.f32.gmra.mrb[0].mxu0 %v503
    %v580 = vpop.f32.mrb[0].mxu0
    %v581 = vadd.f32 %v501, %v580
    %v582 = vpop.f32.mrb[0].mxu0
    %583 = vmatprep.mubr.f32.mxu0 0.0
    %584 = vmatmul.mubr.f32.gmra.mrb[0].mxu0 %v506
    %v585 = vpop.f32.mrb[0].mxu0
    %v586 = vadd.f32 %v501, %v585
    %v587 = vpop.f32.mrb[0].mxu0
    %588 = vmatprep.mubr.f32.mxu0 0.0
    %589 = vmatmul.mubr.f32.gmra.mrb[0].mxu0 %v509
    %v590 = vpop.f32.mrb[0].mxu0
    %v591 = vadd.f32 %v501, %v590
    %v592 = vpop.f32.mrb[0].mxu0
    %593 = vmatprep.mubr.f32.mxu0 0.0
    %594 = vmatmul.mubr.f32.gmra.mrb[0].mxu0 %v512
    %v595 = vpop.f32.mrb[0].mxu0
    %v596 = vadd.f32 %v501, %v595
    %v597 = vpop.f32.mrb[0].mxu0
    %598 = vdwg.mxu0
    %v599 = vadd.f32 %v100, %v581
    %v600 = vadd.f32 %v101, %v586
    %v601 = vadd.f32 %v102, %v591
    %v602 = vadd.f32 %v103, %v596
    %v603 = vsel %vm122, %v599, 0.0
    %604 = vadd.xlane.f32.xlu0 %v603
    %v605 = vpop.xlane.xlu0 %604
    %v606 = vsel %vm122, %v600, 0.0
    %607 = vadd.xlane.f32.xlu0 %v606
    %v608 = vpop.xlane.xlu0 %607
    %v609 = vsel %vm122, %v601, 0.0
    %610 = vadd.xlane.f32.xlu0 %v609
    %v611 = vpop.xlane.xlu0 %610
    %v612 = vsel %vm122, %v602, 0.0
    %613 = vadd.xlane.f32.xlu0 %v612
    %v614 = vpop.xlane.xlu0 %613
    %v615 = vrcp.pop 32.0
    %v616 = vmul.f32 %v605, %v615
    %v617 = vmul.f32 %v608, %v615
    %v618 = vmul.f32 %v611, %v615
    %v619 = vmul.f32 %v614, %v615
    %v620 = vsub.f32 %v599, %v616
    %v621 = vsub.f32 %v600, %v617
    %v622 = vsub.f32 %v601, %v618
    %v623 = vsub.f32 %v602, %v619
    %v624 = vmul.f32 %v620, %v620
    %v625 = vmul.f32 %v621, %v621
    %v626 = vmul.f32 %v622, %v622
    %v627 = vmul.f32 %v623, %v623
    %v628 = vsel %vm122, %v624, 0.0
    %629 = vadd.xlane.f32.xlu0 %v628
    %v630 = vpop.xlane.xlu0 %629
    %v631 = vsel %vm122, %v625, 0.0
    %632 = vadd.xlane.f32.xlu0 %v631
    %v633 = vpop.xlane.xlu0 %632
    %v634 = vsel %vm122, %v626, 0.0
    %635 = vadd.xlane.f32.xlu0 %v634
    %v636 = vpop.xlane.xlu0 %635
    %v637 = vsel %vm122, %v627, 0.0
    %638 = vadd.xlane.f32.xlu0 %v637
    %v639 = vpop.xlane.xlu0 %638
    %v640 = vmul.f32 %v630, %v615
    %v641 = vmul.f32 %v633, %v615
    %v642 = vmul.f32 %v636, %v615
    %v643 = vmul.f32 %v639, %v615
    %v644 = vadd.f32 %v640, 1e-12
    %v645 = vadd.f32 %v641, 1e-12
    %v646 = vadd.f32 %v642, 1e-12
    %v647 = vadd.f32 %v643, 1e-12
    %v648 = vrsqrt.pop %v644
    %v649 = vrsqrt.pop %v645
    %v650 = vrsqrt.pop %v646
    %v651 = vrsqrt.pop %v647
    %v652 = vmul.f32 %v620, %v648
    %v653 = vmul.f32 %v621, %v649
    %v654 = vmul.f32 %v622, %v650
    %v655 = vmul.f32 %v623, %v651
    %v656 = vlaneseq
    %v657 = vshrl.u32 %v656, 7
    %v658 = vsub.s32 4, %v657
    %v659 = vrot.slane %v116, %v658
    %v660 = vmul.f32 %v652, %v659
    %v661 = vmul.f32 %v653, %v659
    %v662 = vmul.f32 %v654, %v659
    %v663 = vmul.f32 %v655, %v659
    %v664 = vlaneseq
    %v665 = vshrl.u32 %v664, 7
    %v666 = vsub.s32 5, %v665
    %v667 = vrot.slane %v116, %v666
    %v668 = vadd.f32 %v660, %v667
    %v669 = vadd.f32 %v661, %v667
    %v670 = vadd.f32 %v662, %v667
    %v671 = vadd.f32 %v663, %v667
    %v672 = vlaneseq
    %v673 = vshrl.u32 %v672, 7
    %v674 = vsub.s32 2, %v673
    %v675 = vrot.slane %v116, %v674
    %v677 = vsel %vm122, %v668, 0
    %v680 = vsel %vm122, %v669, 0
    %v683 = vsel %vm122, %v670, 0
    %v686 = vsel %vm122, %v671, 0
    %688 = vmatprep.subr.mxu0 0.0
    %689 = vmatpush1.msra.mxu0 %v105
    %690 = vmatprep.subr.mxu0 0.0
    %691 = vmatpush1.msra.mxu0 %v108
    %692 = vmatprep.subr.mxu0 0.0
    %693 = vmatpush1.msra.mxu0 %v111
    %694 = vmatprep.subr.mxu0 0.0
    %695 = vmatpush1.msra.mxu0 %v114
    %696 = vmatprep.subr.mxu0 0.0
    %697 = vmatpush1.msra.mxu0 0.0
    %698 = vmatprep.subr.mxu0 0.0
    %699 = vmatpush1.msra.mxu0 0.0
    %700 = vmatprep.subr.mxu0 0.0
    %701 = vmatpush1.msra.mxu0 0.0
    %702 = vmatprep.subr.mxu0 0.0
    %703 = vmatpush1.msra.mxu0 0.0
    %704 = vmatprep.subr.mxu0 0.0
    %705 = vmatpush1.msra.mxu0 0.0
    %706 = vmatprep.subr.mxu0 0.0
    %707 = vmatpush1.msra.mxu0 0.0
    %708 = vmatprep.subr.mxu0 0.0
    %709 = vmatpush1.msra.mxu0 0.0
    %710 = vmatprep.subr.mxu0 0.0
    %711 = vmatpush1.msra.mxu0 0.0
    %712 = vmatprep.subr.mxu0 0.0
    %713 = vmatpush1.msra.mxu0 0.0
    %714 = vmatprep.subr.mxu0 0.0
    %715 = vmatpush1.msra.mxu0 0.0
    %716 = vmatprep.subr.mxu0 0.0
    %717 = vmatpush1.msra.mxu0 0.0
    %718 = vmatprep.subr.mxu0 0.0
    %719 = vmatpush1.msra.mxu0 0.0
    %720 = vmatprep.subr.mxu0 0.0
    %721 = vmatpush1.msra.mxu0 0.0
    %722 = vmatprep.subr.mxu0 0.0
    %723 = vmatpush1.msra.mxu0 0.0
    %724 = vmatprep.subr.mxu0 0.0
    %725 = vmatpush1.msra.mxu0 0.0
    %726 = vmatprep.subr.mxu0 0.0
    %727 = vmatpush1.msra.mxu0 0.0
    %728 = vmatprep.subr.mxu0 0.0
    %729 = vmatpush1.msra.mxu0 0.0
    %730 = vmatprep.subr.mxu0 0.0
    %731 = vmatpush1.msra.mxu0 0.0
    %732 = vmatprep.subr.mxu0 0.0
    %733 = vmatpush1.msra.mxu0 0.0
    %734 = vmatprep.subr.mxu0 0.0
    %735 = vmatpush1.msra.mxu0 0.0
    %736 = vmatprep.subr.mxu0 0.0
    %737 = vmatpush1.msra.mxu0 0.0
    %738 = vmatprep.subr.mxu0 0.0
    %739 = vmatpush1.msra.mxu0 0.0
    %740 = vmatprep.subr.mxu0 0.0
    %741 = vmatpush1.msra.mxu0 0.0
    %742 = vmatprep.subr.mxu0 0.0
    %743 = vmatpush1.msra.mxu0 0.0
    %744 = vmatprep.subr.mxu0 0.0
    %745 = vmatpush1.msra.mxu0 0.0
    %746 = vmatprep.subr.mxu0 0.0
    %747 = vmatpush1.msra.mxu0 0.0
    %748 = vmatprep.subr.mxu0 0.0
    %749 = vmatpush1.msra.mxu0 0.0
    %750 = vmatprep.subr.mxu0 0.0
    %751 = vmatpush1.msra.mxu0 0.0
    %752 = vmatprep.mubr.f32.mxu0 0.0
    %753 = vmatmul.mubr.f32.gmra.mrb[0].mxu0 %v677
    %v754 = vpop.f32.mrb[0].mxu0
    %v755 = vadd.f32 %v675, %v754
    %v756 = vpop.f32.mrb[0].mxu0
    %757 = vmatprep.mubr.f32.mxu0 0.0
    %758 = vmatmul.mubr.f32.gmra.mrb[0].mxu0 %v680
    %v759 = vpop.f32.mrb[0].mxu0
    %v760 = vadd.f32 %v675, %v759
    %v761 = vpop.f32.mrb[0].mxu0
    %762 = vmatprep.mubr.f32.mxu0 0.0
    %763 = vmatmul.mubr.f32.gmra.mrb[0].mxu0 %v683
    %v764 = vpop.f32.mrb[0].mxu0
    %v765 = vadd.f32 %v675, %v764
    %v766 = vpop.f32.mrb[0].mxu0
    %767 = vmatprep.mubr.f32.mxu0 0.0
    %768 = vmatmul.mubr.f32.gmra.mrb[0].mxu0 %v686
    %v769 = vpop.f32.mrb[0].mxu0
    %v770 = vadd.f32 %v675, %v769
    %v771 = vpop.f32.mrb[0].mxu0
    %772 = vdwg.mxu0
    %v773 = vmul.f32 %v755, %v755
    %v774 = vmul.f32 %v760, %v760
    %v775 = vmul.f32 %v765, %v765
    %v776 = vmul.f32 %v770, %v770
    %v777 = vmul.f32 %v755, %v773
    %v778 = vmul.f32 %v760, %v774
    %v779 = vmul.f32 %v765, %v775
    %v780 = vmul.f32 %v770, %v776
    %v781 = vmul.f32 %v777, 0.044715
    %v782 = vmul.f32 %v778, 0.044715
    %v783 = vmul.f32 %v779, 0.044715
    %v784 = vmul.f32 %v780, 0.044715
    %v785 = vadd.f32 %v755, %v781
    %v786 = vadd.f32 %v760, %v782
    %v787 = vadd.f32 %v765, %v783
    %v788 = vadd.f32 %v770, %v784
    %v789 = vmul.f32 %v785, 0.7978846
    %v790 = vmul.f32 %v786, 0.7978846
    %v791 = vmul.f32 %v787, 0.7978846
    %v792 = vmul.f32 %v788, 0.7978846
    %v793 = vtanh.pop %v789
    %v794 = vtanh.pop %v790
    %v795 = vtanh.pop %v791
    %v796 = vtanh.pop %v792
    %v797 = vadd.f32 %v793, 1.0
    %v798 = vadd.f32 %v794, 1.0
    %v799 = vadd.f32 %v795, 1.0
    %v800 = vadd.f32 %v796, 1.0
    %v801 = vmul.f32 %v797, 0.5
    %v802 = vmul.f32 %v798, 0.5
    %v803 = vmul.f32 %v799, 0.5
    %v804 = vmul.f32 %v800, 0.5
    %v805 = vmul.f32 %v755, %v801
    %v806 = vmul.f32 %v760, %v802
    %v807 = vmul.f32 %v765, %v803
    %v808 = vmul.f32 %v770, %v804
    %v809 = vld [vmem:[%s4] sm:$0xff]
    %v810 = vld [vmem:[%s4 + $0x8] sm:$0xff]
    %v811 = vld [vmem:[%s4 + $0x10] sm:$0xff]
    %v812 = vld [vmem:[%s4 + $0x18] sm:$0xff]
    %v813 = vld [vmem:[%s4 + $0x20] sm:$0xff]
    %v814 = vld [vmem:[%s4 + $0x28] sm:$0xff]
    %v815 = vld [vmem:[%s4 + $0x30] sm:$0xff]
    %v816 = vld [vmem:[%s4 + $0x38] sm:$0xff]
    %v817 = vld [vmem:[%s4 + $0x40] sm:$0xff]
    %v818 = vld [vmem:[%s4 + $0x48] sm:$0xff]
    %v819 = vld [vmem:[%s4 + $0x50] sm:$0xff]
    %v820 = vld [vmem:[%s4 + $0x58] sm:$0xff]
    %v821 = vld [vmem:[%s4 + $0x60] sm:$0xff]
    %v822 = vld [vmem:[%s4 + $0x68] sm:$0xff]
    %v823 = vld [vmem:[%s4 + $0x70] sm:$0xff]
    %v824 = vld [vmem:[%s4 + $0x78] sm:$0xff]
    %v825 = vlaneseq
    %v826 = vshrl.u32 %v825, 7
    %v827 = vsub.s32 3, %v826
    %v828 = vrot.slane %v116, %v827
    %829 = vmatprep.subr.mxu0 0.0
    %830 = vmatpush1.msra.mxu0 %v809
    %831 = vmatprep.subr.mxu0 0.0
    %832 = vmatpush1.msra.mxu0 %v810
    %833 = vmatprep.subr.mxu0 0.0
    %834 = vmatpush1.msra.mxu0 %v811
    %835 = vmatprep.subr.mxu0 0.0
    %836 = vmatpush1.msra.mxu0 %v812
    %837 = vmatprep.subr.mxu0 0.0
    %838 = vmatpush1.msra.mxu0 %v813
    %839 = vmatprep.subr.mxu0 0.0
    %840 = vmatpush1.msra.mxu0 %v814
    %841 = vmatprep.subr.mxu0 0.0
    %842 = vmatpush1.msra.mxu0 %v815
    %843 = vmatprep.subr.mxu0 0.0
    %844 = vmatpush1.msra.mxu0 %v816
    %845 = vmatprep.subr.mxu0 0.0
    %846 = vmatpush1.msra.mxu0 %v817
    %847 = vmatprep.subr.mxu0 0.0
    %848 = vmatpush1.msra.mxu0 %v818
    %849 = vmatprep.subr.mxu0 0.0
    %850 = vmatpush1.msra.mxu0 %v819
    %851 = vmatprep.subr.mxu0 0.0
    %852 = vmatpush1.msra.mxu0 %v820
    %853 = vmatprep.subr.mxu0 0.0
    %854 = vmatpush1.msra.mxu0 %v821
    %855 = vmatprep.subr.mxu0 0.0
    %856 = vmatpush1.msra.mxu0 %v822
    %857 = vmatprep.subr.mxu0 0.0
    %858 = vmatpush1.msra.mxu0 %v823
    %859 = vmatprep.subr.mxu0 0.0
    %860 = vmatpush1.msra.mxu0 %v824
    %861 = vmatprep.subr.mxu0 0.0
    %862 = vmatpush1.msra.mxu0 0.0
    %863 = vmatprep.subr.mxu0 0.0
    %864 = vmatpush1.msra.mxu0 0.0
    %865 = vmatprep.subr.mxu0 0.0
    %866 = vmatpush1.msra.mxu0 0.0
    %867 = vmatprep.subr.mxu0 0.0
    %868 = vmatpush1.msra.mxu0 0.0
    %869 = vmatprep.subr.mxu0 0.0
    %870 = vmatpush1.msra.mxu0 0.0
    %871 = vmatprep.subr.mxu0 0.0
    %872 = vmatpush1.msra.mxu0 0.0
    %873 = vmatprep.subr.mxu0 0.0
    %874 = vmatpush1.msra.mxu0 0.0
    %875 = vmatprep.subr.mxu0 0.0
    %876 = vmatpush1.msra.mxu0 0.0
    %877 = vmatprep.subr.mxu0 0.0
    %878 = vmatpush1.msra.mxu0 0.0
    %879 = vmatprep.subr.mxu0 0.0
    %880 = vmatpush1.msra.mxu0 0.0
    %881 = vmatprep.subr.mxu0 0.0
    %882 = vmatpush1.msra.mxu0 0.0
    %883 = vmatprep.subr.mxu0 0.0
    %884 = vmatpush1.msra.mxu0 0.0
    %885 = vmatprep.subr.mxu0 0.0
    %886 = vmatpush1.msra.mxu0 0.0
    %887 = vmatprep.subr.mxu0 0.0
    %888 = vmatpush1.msra.mxu0 0.0
    %889 = vmatprep.subr.mxu0 0.0
    %890 = vmatpush1.msra.mxu0 0.0
    %891 = vmatprep.subr.mxu0 0.0
    %892 = vmatpush1.msra.mxu0 0.0
    %893 = vmatprep.mubr.f32.mxu0 0.0
    %894 = vmatmul.mubr.f32.gmra.mrb[0].mxu0 %v805
    %v895 = vpop.f32.mrb[0].mxu0
    %v896 = vadd.f32 %v828, %v895
    %v897 = vpop.f32.mrb[0].mxu0
    %898 = vmatprep.mubr.f32.mxu0 0.0
    %899 = vmatmul.mubr.f32.gmra.mrb[0].mxu0 %v806
    %v900 = vpop.f32.mrb[0].mxu0
    %v901 = vadd.f32 %v828, %v900
    %v902 = vpop.f32.mrb[0].mxu0
    %903 = vmatprep.mubr.f32.mxu0 0.0
    %904 = vmatmul.mubr.f32.gmra.mrb[0].mxu0 %v807
    %v905 = vpop.f32.mrb[0].mxu0
    %v906 = vadd.f32 %v828, %v905
    %v907 = vpop.f32.mrb[0].mxu0
    %908 = vmatprep.mubr.f32.mxu0 0.0
    %909 = vmatmul.mubr.f32.gmra.mrb[0].mxu0 %v808
    %v910 = vpop.f32.mrb[0].mxu0
    %v911 = vadd.f32 %v828, %v910
    %v912 = vpop.f32.mrb[0].mxu0
    %913 = vdwg.mxu0
    %v914 = vadd.f32 %v668, %v896
    %v915 = vadd.f32 %v669, %v901
    %v916 = vadd.f32 %v670, %v906
    %v917 = vadd.f32 %v671, %v911
    %v918 = vsel %vm122, %v914, 0.0
    %919 = vadd.xlane.f32.xlu0 %v918
    %v920 = vpop.xlane.xlu0 %919
    %v921 = vsel %vm122, %v915, 0.0
    %922 = vadd.xlane.f32.xlu0 %v921
    %v923 = vpop.xlane.xlu0 %922
    %v924 = vsel %vm122, %v916, 0.0
    %925 = vadd.xlane.f32.xlu0 %v924
    %v926 = vpop.xlane.xlu0 %925
    %v927 = vsel %vm122, %v917, 0.0
    %928 = vadd.xlane.f32.xlu0 %v927
    %v929 = vpop.xlane.xlu0 %928
    %v930 = vmul.f32 %v920, %v615
    %v931 = vmul.f32 %v923, %v615
    %v932 = vmul.f32 %v926, %v615
    %v933 = vmul.f32 %v929, %v615
    %v934 = vsub.f32 %v914, %v930
    %v935 = vsub.f32 %v915, %v931
    %v936 = vsub.f32 %v916, %v932
    %v937 = vsub.f32 %v917, %v933
    %v938 = vmul.f32 %v934, %v934
    %v939 = vmul.f32 %v935, %v935
    %v940 = vmul.f32 %v936, %v936
    %v941 = vmul.f32 %v937, %v937
    %v942 = vsel %vm122, %v938, 0.0
    %943 = vadd.xlane.f32.xlu0 %v942
    %v944 = vpop.xlane.xlu0 %943
    %v945 = vsel %vm122, %v939, 0.0
    %946 = vadd.xlane.f32.xlu0 %v945
    %v947 = vpop.xlane.xlu0 %946
    %v948 = vsel %vm122, %v940, 0.0
    %949 = vadd.xlane.f32.xlu0 %v948
    %v950 = vpop.xlane.xlu0 %949
    %v951 = vsel %vm122, %v941, 0.0
    %952 = vadd.xlane.f32.xlu0 %v951
    %v953 = vpop.xlane.xlu0 %952
    %v954 = vmul.f32 %v944, %v615
    %v955 = vmul.f32 %v947, %v615
    %v956 = vmul.f32 %v950, %v615
    %v957 = vmul.f32 %v953, %v615
    %v958 = vadd.f32 %v954, 1e-12
    %v959 = vadd.f32 %v955, 1e-12
    %v960 = vadd.f32 %v956, 1e-12
    %v961 = vadd.f32 %v957, 1e-12
    %v962 = vrsqrt.pop %v958
    %v963 = vrsqrt.pop %v959
    %v964 = vrsqrt.pop %v960
    %v965 = vrsqrt.pop %v961
    %v966 = vmul.f32 %v934, %v962
    %v967 = vmul.f32 %v935, %v963
    %v968 = vmul.f32 %v936, %v964
    %v969 = vmul.f32 %v937, %v965
    %v970 = vlaneseq
    %v971 = vshrl.u32 %v970, 7
    %v972 = vsub.s32 6, %v971
    %v973 = vrot.slane %v116, %v972
    %v974 = vmul.f32 %v966, %v973
    %v975 = vmul.f32 %v967, %v973
    %v976 = vmul.f32 %v968, %v973
    %v977 = vmul.f32 %v969, %v973
    %v978 = vlaneseq
    %v979 = vshrl.u32 %v978, 7
    %v980 = vsub.s32 7, %v979
    %v981 = vrot.slane %v116, %v980
    %v982 = vadd.f32 %v974, %v981
    %v983 = vadd.f32 %v975, %v981
    %v984 = vadd.f32 %v976, %v981
    %v985 = vadd.f32 %v977, %v981
    %v986 = vld [vmem:[%s2] sm:$0xff]
    %v987 = vld [vmem:[%s2 + $0x8] sm:$0xff]
    %v988 = vld [vmem:[%s2 + $0x10] sm:$0xff]
    %v990 = vsel %vm122, %v986, 0
    %v993 = vsel %vm122, %v987, 0
    %v996 = vsel %vm122, %v988, 0
    %998 = vmatprep.subr.mxu0 0.0
    %999 = vmatpush1.msra.mxu0 %v982
    %1000 = vmatprep.subr.mxu0 0.0
    %1001 = vmatpush1.msra.mxu0 %v983
    %1002 = vmatprep.subr.mxu0 0.0
    %1003 = vmatpush1.msra.mxu0 %v984
    %1004 = vmatprep.subr.mxu0 0.0
    %1005 = vmatpush1.msra.mxu0 %v985
    %1006 = vmatprep.subr.mxu0 0.0
    %1007 = vmatpush1.msra.mxu0 0.0
    %1008 = vmatprep.subr.mxu0 0.0
    %1009 = vmatpush1.msra.mxu0 0.0
    %1010 = vmatprep.subr.mxu0 0.0
    %1011 = vmatpush1.msra.mxu0 0.0
    %1012 = vmatprep.subr.mxu0 0.0
    %1013 = vmatpush1.msra.mxu0 0.0
    %1014 = vmatprep.subr.mxu0 0.0
    %1015 = vmatpush1.msra.mxu0 0.0
    %1016 = vmatprep.subr.mxu0 0.0
    %1017 = vmatpush1.msra.mxu0 0.0
    %1018 = vmatprep.subr.mxu0 0.0
    %1019 = vmatpush1.msra.mxu0 0.0
    %1020 = vmatprep.subr.mxu0 0.0
    %1021 = vmatpush1.msra.mxu0 0.0
    %1022 = vmatprep.subr.mxu0 0.0
    %1023 = vmatpush1.msra.mxu0 0.0
    %1024 = vmatprep.subr.mxu0 0.0
    %1025 = vmatpush1.msra.mxu0 0.0
    %1026 = vmatprep.subr.mxu0 0.0
    %1027 = vmatpush1.msra.mxu0 0.0
    %1028 = vmatprep.subr.mxu0 0.0
    %1029 = vmatpush1.msra.mxu0 0.0
    %1030 = vmatprep.subr.mxu0 0.0
    %1031 = vmatpush1.msra.mxu0 0.0
    %1032 = vmatprep.subr.mxu0 0.0
    %1033 = vmatpush1.msra.mxu0 0.0
    %1034 = vmatprep.subr.mxu0 0.0
    %1035 = vmatpush1.msra.mxu0 0.0
    %1036 = vmatprep.subr.mxu0 0.0
    %1037 = vmatpush1.msra.mxu0 0.0
    %1038 = vmatprep.subr.mxu0 0.0
    %1039 = vmatpush1.msra.mxu0 0.0
    %1040 = vmatprep.subr.mxu0 0.0
    %1041 = vmatpush1.msra.mxu0 0.0
    %1042 = vmatprep.subr.mxu0 0.0
    %1043 = vmatpush1.msra.mxu0 0.0
    %1044 = vmatprep.subr.mxu0 0.0
    %1045 = vmatpush1.msra.mxu0 0.0
    %1046 = vmatprep.subr.mxu0 0.0
    %1047 = vmatpush1.msra.mxu0 0.0
    %1048 = vmatprep.subr.mxu0 0.0
    %1049 = vmatpush1.msra.mxu0 0.0
    %1050 = vmatprep.subr.mxu0 0.0
    %1051 = vmatpush1.msra.mxu0 0.0
    %1052 = vmatprep.subr.mxu0 0.0
    %1053 = vmatpush1.msra.mxu0 0.0
    %1054 = vmatprep.subr.mxu0 0.0
    %1055 = vmatpush1.msra.mxu0 0.0
    %1056 = vmatprep.subr.mxu0 0.0
    %1057 = vmatpush1.msra.mxu0 0.0
    %1058 = vmatprep.subr.mxu0 0.0
    %1059 = vmatpush1.msra.mxu0 0.0
    %1060 = vmatprep.subr.mxu0 0.0
    %1061 = vmatpush1.msra.mxu0 0.0
    %1062 = vmatprep.mubr.f32.mxu0 0.0
    %1063 = vmatmul.mubr.f32.gmra.mrb[0].mxu0 %v990
    %v1064 = vpop.f32.mrb[0].mxu0
    %v1065 = vadd.f32 0.0, %v1064
    %v1066 = vpop.f32.mrb[0].mxu0
    %1067 = vmatprep.mubr.f32.mxu0 0.0
    %1068 = vmatmul.mubr.f32.gmra.mrb[0].mxu0 %v993
    %v1069 = vpop.f32.mrb[0].mxu0
    %v1070 = vadd.f32 0.0, %v1069
    %v1071 = vpop.f32.mrb[0].mxu0
    %1072 = vmatprep.mubr.f32.mxu0 0.0
    %1073 = vmatmul.mubr.f32.gmra.mrb[0].mxu0 %v996
    %v1074 = vpop.f32.mrb[0].mxu0
    %v1075 = vadd.f32 0.0, %v1074
    %v1076 = vpop.f32.mrb[0].mxu0
    %1077 = vdwg.mxu0
    %1079 = vrot.lane.b32.xlu0 %v1070, 32
    %v1080 = vpop.permute.xlu0 %1079
    %1083 = vrot.lane.b32.xlu0 %v1075, 64
    %v1084 = vpop.permute.xlu0 %1083
    %v1086 = vsel %vm122, %v1065, %v1080
    %vm1087 = vcmask 523264
    %v1088 = vsel %vm1087, %v1086, %v1084
    %vm1089 = vcmp.ne.f32.partialorder %v1088, %v1088
    %v1090 = vsel %vm1089, 0.0, %v1088
    %v1091 = vpack.c.bf16 %v1090, %v1090
    %v1092 = vld [vmem:[#allocation8] sm:$0xff]
    %v1093 = vld [vmem:[#allocation8 + $0x8] sm:$0xff]
    %v1094 = vld [vmem:[#allocation8 + $0x10] sm:$0xff]
    %v1095 = vld [vmem:[#allocation8 + $0x18] sm:$0xff]
    %v1096 = vld [vmem:[#allocation8 + $0x20] sm:$0xff]
    %v1097 = vld [vmem:[#allocation8 + $0x28] sm:$0xff]
    %v1098 = vld [vmem:[#allocation8 + $0x30] sm:$0xff]
    %v1099 = vld [vmem:[#allocation8 + $0x38] sm:$0xff]
    %v1100 = vld [vmem:[#allocation8 + $0x40] sm:$0xff]
    %v1101 = vld [vmem:[#allocation8 + $0x48] sm:$0xff]
    %v1102 = vld [vmem:[#allocation8 + $0x50] sm:$0xff]
    %v1103 = vld [vmem:[#allocation8 + $0x58] sm:$0xff]
    %v1104 = vld [vmem:[#allocation8 + $0x60] sm:$0xff]
    %v1105 = vld [vmem:[#allocation8 + $0x68] sm:$0xff]
    %v1106 = vld [vmem:[#allocation8 + $0x70] sm:$0xff]
    %v1107 = vld [vmem:[#allocation8 + $0x78] sm:$0xff]
    %v1108 = vld [vmem:[#allocation8 + $0x80] sm:$0xff]
    %v1109 = vld [vmem:[#allocation8 + $0x88] sm:$0xff]
    %v1110 = vld [vmem:[#allocation8 + $0x90] sm:$0xff]
    %v1111 = vld [vmem:[#allocation8 + $0x98] sm:$0xff]
    %v1112 = vld [vmem:[#allocation8 + $0xa0] sm:$0xff]
    %v1113 = vld [vmem:[#allocation8 + $0xa8] sm:$0xff]
    %v1114 = vld [vmem:[#allocation8 + $0xb0] sm:$0xff]
    %v1115 = vld [vmem:[#allocation8 + $0xb8] sm:$0xff]
    %v1116 = vld [vmem:[#allocation8 + $0xc0] sm:$0xff]
    %v1117 = vld [vmem:[#allocation8 + $0xc8] sm:$0xff]
    %v1118 = vld [vmem:[#allocation8 + $0xd0] sm:$0xff]
    %v1119 = vld [vmem:[#allocation8 + $0xd8] sm:$0xff]
    %v1120 = vld [vmem:[#allocation8 + $0xe0] sm:$0xff]
    %v1121 = vld [vmem:[#allocation8 + $0xe8] sm:$0xff]
    %v1122 = vld [vmem:[#allocation8 + $0xf0] sm:$0xff]
    %v1123 = vld [vmem:[#allocation8 + $0xf8] sm:$0xff]
    %v1124 = vld [vmem:[#allocation8 + $0x100] sm:$0xff]
    %v1125 = vld [vmem:[#allocation8 + $0x108] sm:$0xff]
    %v1126 = vld [vmem:[#allocation8 + $0x110] sm:$0xff]
    %v1127 = vld [vmem:[#allocation8 + $0x118] sm:$0xff]
    %v1128 = vld [vmem:[#allocation8 + $0x120] sm:$0xff]
    %v1129 = vld [vmem:[#allocation8 + $0x128] sm:$0xff]
    %v1130 = vld [vmem:[#allocation8 + $0x130] sm:$0xff]
    %v1131 = vld [vmem:[#allocation8 + $0x138] sm:$0xff]
    %v1132 = vld [vmem:[#allocation8 + $0x140] sm:$0xff]
    %v1133 = vld [vmem:[#allocation8 + $0x148] sm:$0xff]
    %v1134 = vld [vmem:[#allocation8 + $0x150] sm:$0xff]
    %v1135 = vld [vmem:[#allocation8 + $0x158] sm:$0xff]
    %v1136 = vld [vmem:[#allocation8 + $0x160] sm:$0xff]
    %v1137 = vld [vmem:[#allocation8 + $0x168] sm:$0xff]
    %v1138 = vld [vmem:[#allocation8 + $0x170] sm:$0xff]
    %v1139 = vld [vmem:[#allocation8 + $0x178] sm:$0xff]
    %v1140 = vld [vmem:[#allocation10] sm:$0xff]
    %v1142 = vlaneseq
    %v1143 = vshrl.u32 %v1142, 7
    %v1144 = vsub.s32 0, %v1143
    %v1145 = vrot.slane %v1140, %v1144
    %v1146 = vlaneseq
    %v1147 = vshrl.u32 %v1146, 7
    %v1148 = vsub.s32 1, %v1147
    %v1149 = vrot.slane %v1140, %v1148
    %v1150 = vlaneseq
    %v1151 = vshrl.u32 %v1150, 7
    %v1152 = vsub.s32 2, %v1151
    %v1153 = vrot.slane %v1140, %v1152
    %v1154 = vlaneseq
    %v1155 = vshrl.u32 %v1154, 7
    %v1156 = vsub.s32 3, %v1155
    %v1157 = vrot.slane %v1140, %v1156
    %v1158 = vlaneseq
    %v1159 = vshrl.u32 %v1158, 7
    %v1160 = vsub.s32 4, %v1159
    %v1161 = vrot.slane %v1140, %v1160
    %v1162 = vlaneseq
    %v1163 = vshrl.u32 %v1162, 7
    %v1164 = vsub.s32 5, %v1163
    %v1165 = vrot.slane %v1140, %v1164
    %v1166 = vlaneseq
    %v1167 = vshrl.u32 %v1166, 7
    %v1168 = vsub.s32 6, %v1167
    %v1169 = vrot.slane %v1140, %v1168
    %v1170 = vlaneseq
    %v1171 = vshrl.u32 %v1170, 7
    %v1172 = vsub.s32 7, %v1171
    %v1173 = vrot.slane %v1140, %v1172
    %v1230 = vunpack.c.l.b16 %v1092
    %v1231 = vunpack.c.h.b16 %v1092
    %v1232 = vunpack.c.l.b16 %v1093
    %v1233 = vunpack.c.h.b16 %v1093
    %v1234 = vunpack.c.l.b16 %v1094
    %v1235 = vunpack.c.h.b16 %v1094
    %v1236 = vunpack.c.l.b16 %v1095
    %v1237 = vunpack.c.h.b16 %v1095
    %v1238 = vunpack.c.l.b16 %v1096
    %v1239 = vunpack.c.h.b16 %v1096
    %v1240 = vunpack.c.l.b16 %v1097
    %v1241 = vunpack.c.h.b16 %v1097
    %v1242 = vunpack.c.l.b16 %v1098
    %v1243 = vunpack.c.h.b16 %v1098
    %v1244 = vunpack.c.l.b16 %v1099
    %v1245 = vunpack.c.h.b16 %v1099
    %v1246 = vunpack.c.l.b16 %v1100
    %v1247 = vunpack.c.h.b16 %v1100
    %v1248 = vunpack.c.l.b16 %v1101
    %v1249 = vunpack.c.h.b16 %v1101
    %v1250 = vunpack.c.l.b16 %v1102
    %v1251 = vunpack.c.h.b16 %v1102
    %v1252 = vunpack.c.l.b16 %v1103
    %v1253 = vunpack.c.h.b16 %v1103
    %v1254 = vunpack.c.l.b16 %v1104
    %v1255 = vunpack.c.h.b16 %v1104
    %v1256 = vunpack.c.l.b16 %v1105
    %v1257 = vunpack.c.h.b16 %v1105
    %v1258 = vunpack.c.l.b16 %v1106
    %v1259 = vunpack.c.h.b16 %v1106
    %v1260 = vunpack.c.l.b16 %v1107
    %v1261 = vunpack.c.h.b16 %v1107
    %v1262 = vunpack.c.l.b16 %v1108
    %v1263 = vunpack.c.h.b16 %v1108
    %v1264 = vunpack.c.l.b16 %v1109
    %v1265 = vunpack.c.h.b16 %v1109
    %v1266 = vunpack.c.l.b16 %v1110
    %v1267 = vunpack.c.h.b16 %v1110
    %v1268 = vunpack.c.l.b16 %v1111
    %v1269 = vunpack.c.h.b16 %v1111
    %v1270 = vunpack.c.l.b16 %v1112
    %v1271 = vunpack.c.h.b16 %v1112
    %v1272 = vunpack.c.l.b16 %v1113
    %v1273 = vunpack.c.h.b16 %v1113
    %v1274 = vunpack.c.l.b16 %v1114
    %v1275 = vunpack.c.h.b16 %v1114
    %v1276 = vunpack.c.l.b16 %v1115
    %v1277 = vunpack.c.h.b16 %v1115
    %v1278 = vunpack.c.l.b16 %v1116
    %v1279 = vunpack.c.h.b16 %v1116
    %v1280 = vunpack.c.l.b16 %v1117
    %v1281 = vunpack.c.h.b16 %v1117
    %v1282 = vunpack.c.l.b16 %v1118
    %v1283 = vunpack.c.h.b16 %v1118
    %v1284 = vunpack.c.l.b16 %v1119
    %v1285 = vunpack.c.h.b16 %v1119
    %v1286 = vunpack.c.l.b16 %v1120
    %v1287 = vunpack.c.h.b16 %v1120
    %v1288 = vunpack.c.l.b16 %v1121
    %v1289 = vunpack.c.h.b16 %v1121
    %v1290 = vunpack.c.l.b16 %v1122
    %v1291 = vunpack.c.h.b16 %v1122
    %v1292 = vunpack.c.l.b16 %v1123
    %v1293 = vunpack.c.h.b16 %v1123
    %v1294 = vunpack.c.l.b16 %v1124
    %v1295 = vunpack.c.h.b16 %v1124
    %v1296 = vunpack.c.l.b16 %v1125
    %v1297 = vunpack.c.h.b16 %v1125
    %v1298 = vunpack.c.l.b16 %v1126
    %v1299 = vunpack.c.h.b16 %v1126
    %v1300 = vunpack.c.l.b16 %v1127
    %v1301 = vunpack.c.h.b16 %v1127
    %v1302 = vunpack.c.l.b16 %v1128
    %v1303 = vunpack.c.h.b16 %v1128
    %v1304 = vunpack.c.l.b16 %v1129
    %v1305 = vunpack.c.h.b16 %v1129
    %v1306 = vunpack.c.l.b16 %v1130
    %v1307 = vunpack.c.h.b16 %v1130
    %v1308 = vunpack.c.l.b16 %v1131
    %v1309 = vunpack.c.h.b16 %v1131
    %v1310 = vunpack.c.l.b16 %v1132
    %v1311 = vunpack.c.h.b16 %v1132
    %v1312 = vunpack.c.l.b16 %v1133
    %v1313 = vunpack.c.h.b16 %v1133
    %v1314 = vunpack.c.l.b16 %v1134
    %v1315 = vunpack.c.h.b16 %v1134
    %v1316 = vunpack.c.l.b16 %v1135
    %v1317 = vunpack.c.h.b16 %v1135
    %v1318 = vunpack.c.l.b16 %v1136
    %v1319 = vunpack.c.h.b16 %v1136
    %v1320 = vunpack.c.l.b16 %v1137
    %v1321 = vunpack.c.h.b16 %v1137
    %v1322 = vunpack.c.l.b16 %v1138
    %v1323 = vunpack.c.h.b16 %v1138
    %v1324 = vunpack.c.l.b16 %v1139
    %v1325 = vunpack.c.h.b16 %v1139
    %v1326 = vpack.c.b16 %v1238, %v1230
    %v1327 = vpack.c.b16 %v1239, %v1231
    %v1328 = vpack.c.b16 %v1240, %v1232
    %v1329 = vpack.c.b16 %v1241, %v1233
    %v1330 = vpack.c.b16 %v1242, %v1234
    %v1331 = vpack.c.b16 %v1243, %v1235
    %v1332 = vpack.c.b16 %v1244, %v1236
    %v1333 = vpack.c.b16 %v1245, %v1237
    %v1334 = vpack.c.b16 %v1254, %v1246
    %v1335 = vpack.c.b16 %v1255, %v1247
    %v1336 = vpack.c.b16 %v1256, %v1248
    %v1337 = vpack.c.b16 %v1257, %v1249
    %v1338 = vpack.c.b16 %v1258, %v1250
    %v1339 = vpack.c.b16 %v1259, %v1251
    %v1340 = vpack.c.b16 %v1260, %v1252
    %v1341 = vpack.c.b16 %v1261, %v1253
    %v1342 = vpack.c.b16 %v1270, %v1262
    %v1343 = vpack.c.b16 %v1271, %v1263
    %v1344 = vpack.c.b16 %v1272, %v1264
    %v1345 = vpack.c.b16 %v1273, %v1265
    %v1346 = vpack.c.b16 %v1274, %v1266
    %v1347 = vpack.c.b16 %v1275, %v1267
    %v1348 = vpack.c.b16 %v1276, %v1268
    %v1349 = vpack.c.b16 %v1277, %v1269
    %v1350 = vpack.c.b16 %v1286, %v1278
    %v1351 = vpack.c.b16 %v1287, %v1279
    %v1352 = vpack.c.b16 %v1288, %v1280
    %v1353 = vpack.c.b16 %v1289, %v1281
    %v1354 = vpack.c.b16 %v1290, %v1282
    %v1355 = vpack.c.b16 %v1291, %v1283
    %v1356 = vpack.c.b16 %v1292, %v1284
    %v1357 = vpack.c.b16 %v1293, %v1285
    %v1358 = vpack.c.b16 %v1302, %v1294
    %v1359 = vpack.c.b16 %v1303, %v1295
    %v1360 = vpack.c.b16 %v1304, %v1296
    %v1361 = vpack.c.b16 %v1305, %v1297
    %v1362 = vpack.c.b16 %v1306, %v1298
    %v1363 = vpack.c.b16 %v1307, %v1299
    %v1364 = vpack.c.b16 %v1308, %v1300
    %v1365 = vpack.c.b16 %v1309, %v1301
    %v1366 = vpack.c.b16 %v1318, %v1310
    %v1367 = vpack.c.b16 %v1319, %v1311
    %v1368 = vpack.c.b16 %v1320, %v1312
    %v1369 = vpack.c.b16 %v1321, %v1313
    %v1370 = vpack.c.b16 %v1322, %v1314
    %v1371 = vpack.c.b16 %v1323, %v1315
    %v1372 = vpack.c.b16 %v1324, %v1316
    %v1373 = vpack.c.b16 %v1325, %v1317
    %vm1422 = vcmask 785408
    %v1424 = vsel %vm1422, %v1091, 0
    %1426 = vmatprep.subr.bf16.mxu0 %v1327
    %1427 = vmatpush1.bf16.msra.mxu0 %v1326
    %1428 = vmatprep.subr.bf16.mxu0 %v1335
    %1429 = vmatpush1.bf16.msra.mxu0 %v1334
    %1430 = vmatprep.subr.bf16.mxu0 %v1343
    %1431 = vmatpush1.bf16.msra.mxu0 %v1342
    %1432 = vmatprep.subr.bf16.mxu0 %v1351
    %1433 = vmatpush1.bf16.msra.mxu0 %v1350
    %1434 = vmatprep.subr.bf16.mxu0 %v1359
    %1435 = vmatpush1.bf16.msra.mxu0 %v1358
    %1436 = vmatprep.subr.bf16.mxu0 %v1367
    %1437 = vmatpush1.bf16.msra.mxu0 %v1366
    %1438 = vmatprep.subr.bf16.mxu0 0
    %1439 = vmatpush1.bf16.msra.mxu0 0
    %1440 = vmatprep.subr.bf16.mxu0 0
    %1441 = vmatpush1.bf16.msra.mxu0 0
    %1442 = vmatprep.subr.bf16.mxu0 0
    %1443 = vmatpush1.bf16.msra.mxu0 0
    %1444 = vmatprep.subr.bf16.mxu0 0
    %1445 = vmatpush1.bf16.msra.mxu0 0
    %1446 = vmatprep.subr.bf16.mxu0 0
    %1447 = vmatpush1.bf16.msra.mxu0 0
    %1448 = vmatprep.subr.bf16.mxu0 0
    %1449 = vmatpush1.bf16.msra.mxu0 0
    %1450 = vmatprep.subr.bf16.mxu0 0
    %1451 = vmatpush1.bf16.msra.mxu0 0
    %1452 = vmatprep.subr.bf16.mxu0 0
    %1453 = vmatpush1.bf16.msra.mxu0 0
    %1454 = vmatprep.subr.bf16.mxu0 0
    %1455 = vmatpush1.bf16.msra.mxu0 0
    %1456 = vmatprep.subr.bf16.mxu0 0
    %1457 = vmatpush1.bf16.msra.mxu0 0
    %1458 = vmatprep.mubr.bf16.mxu0 0
    %1459 = vmatmul.mubr.bf16.gmra.mrb[0].mxu0 %v1424
    %v1460 = vpop.f32.mrb[0].mxu0
    %v1461 = vadd.f32 %v1145, %v1460
    %v1462 = vpop.f32.mrb[0].mxu0
    %v1463 = vadd.f32 %v1149, %v1462
    %v1464 = vpop.f32.mrb[0].mxu0
    %v1465 = vpop.f32.mrb[0].mxu0
    %1466 = vdwg.mxu0
    %1467 = vmatprep.subr.bf16.mxu0 %v1329
    %1468 = vmatpush1.bf16.msra.mxu0 %v1328
    %1469 = vmatprep.subr.bf16.mxu0 %v1337
    %1470 = vmatpush1.bf16.msra.mxu0 %v1336
    %1471 = vmatprep.subr.bf16.mxu0 %v1345
    %1472 = vmatpush1.bf16.msra.mxu0 %v1344
    %1473 = vmatprep.subr.bf16.mxu0 %v1353
    %1474 = vmatpush1.bf16.msra.mxu0 %v1352
    %1475 = vmatprep.subr.bf16.mxu0 %v1361
    %1476 = vmatpush1.bf16.msra.mxu0 %v1360
    %1477 = vmatprep.subr.bf16.mxu0 %v1369
    %1478 = vmatpush1.bf16.msra.mxu0 %v1368
    %1479 = vmatprep.subr.bf16.mxu0 0
    %1480 = vmatpush1.bf16.msra.mxu0 0
    %1481 = vmatprep.subr.bf16.mxu0 0
    %1482 = vmatpush1.bf16.msra.mxu0 0
    %1483 = vmatprep.subr.bf16.mxu0 0
    %1484 = vmatpush1.bf16.msra.mxu0 0
    %1485 = vmatprep.subr.bf16.mxu0 0
    %1486 = vmatpush1.bf16.msra.mxu0 0
    %1487 = vmatprep.subr.bf16.mxu0 0
    %1488 = vmatpush1.bf16.msra.mxu0 0
    %1489 = vmatprep.subr.bf16.mxu0 0
    %1490 = vmatpush1.bf16.msra.mxu0 0
    %1491 = vmatprep.subr.bf16.mxu0 0
    %1492 = vmatpush1.bf16.msra.mxu0 0
    %1493 = vmatprep.subr.bf16.mxu0 0
    %1494 = vmatpush1.bf16.msra.mxu0 0
    %1495 = vmatprep.subr.bf16.mxu0 0
    %1496 = vmatpush1.bf16.msra.mxu0 0
    %1497 = vmatprep.subr.bf16.mxu0 0
    %1498 = vmatpush1.bf16.msra.mxu0 0
    %1499 = vmatprep.mubr.bf16.mxu0 0
    %1500 = vmatmul.mubr.bf16.gmra.mrb[0].mxu0 %v1424
    %v1501 = vpop.f32.mrb[0].mxu0
    %v1502 = vadd.f32 %v1153, %v1501
    %v1503 = vpop.f32.mrb[0].mxu0
    %v1504 = vadd.f32 %v1157, %v1503
    %v1505 = vpop.f32.mrb[0].mxu0
    %v1506 = vpop.f32.mrb[0].mxu0
    %1507 = vdwg.mxu0
    %1508 = vmatprep.subr.bf16.mxu0 %v1331
    %1509 = vmatpush1.bf16.msra.mxu0 %v1330
    %1510 = vmatprep.subr.bf16.mxu0 %v1339
    %1511 = vmatpush1.bf16.msra.mxu0 %v1338
    %1512 = vmatprep.subr.bf16.mxu0 %v1347
    %1513 = vmatpush1.bf16.msra.mxu0 %v1346
    %1514 = vmatprep.subr.bf16.mxu0 %v1355
    %1515 = vmatpush1.bf16.msra.mxu0 %v1354
    %1516 = vmatprep.subr.bf16.mxu0 %v1363
    %1517 = vmatpush1.bf16.msra.mxu0 %v1362
    %1518 = vmatprep.subr.bf16.mxu0 %v1371
    %1519 = vmatpush1.bf16.msra.mxu0 %v1370
    %1520 = vmatprep.subr.bf16.mxu0 0
    %1521 = vmatpush1.bf16.msra.mxu0 0
    %1522 = vmatprep.subr.bf16.mxu0 0
    %1523 = vmatpush1.bf16.msra.mxu0 0
    %1524 = vmatprep.subr.bf16.mxu0 0
    %1525 = vmatpush1.bf16.msra.mxu0 0
    %1526 = vmatprep.subr.bf16.mxu0 0
    %1527 = vmatpush1.bf16.msra.mxu0 0
    %1528 = vmatprep.subr.bf16.mxu0 0
    %1529 = vmatpush1.bf16.msra.mxu0 0
    %1530 = vmatprep.subr.bf16.mxu0 0
    %1531 = vmatpush1.bf16.msra.mxu0 0
    %1532 = vmatprep.subr.bf16.mxu0 0
    %1533 = vmatpush1.bf16.msra.mxu0 0
    %1534 = vmatprep.subr.bf16.mxu0 0
    %1535 = vmatpush1.bf16.msra.mxu0 0
    %1536 = vmatprep.subr.bf16.mxu0 0
    %1537 = vmatpush1.bf16.msra.mxu0 0
    %1538 = vmatprep.subr.bf16.mxu0 0
    %1539 = vmatpush1.bf16.msra.mxu0 0
    %1540 = vmatprep.mubr.bf16.mxu0 0
    %1541 = vmatmul.mubr.bf16.gmra.mrb[0].mxu0 %v1424
    %v1542 = vpop.f32.mrb[0].mxu0
    %v1543 = vadd.f32 %v1161, %v1542
    %v1544 = vpop.f32.mrb[0].mxu0
    %v1545 = vadd.f32 %v1165, %v1544
    %v1546 = vpop.f32.mrb[0].mxu0
    %v1547 = vpop.f32.mrb[0].mxu0
    %1548 = vdwg.mxu0
    %1549 = vmatprep.subr.bf16.mxu0 %v1333
    %1550 = vmatpush1.bf16.msra.mxu0 %v1332
    %1551 = vmatprep.subr.bf16.mxu0 %v1341
    %1552 = vmatpush1.bf16.msra.mxu0 %v1340
    %1553 = vmatprep.subr.bf16.mxu0 %v1349
    %1554 = vmatpush1.bf16.msra.mxu0 %v1348
    %1555 = vmatprep.subr.bf16.mxu0 %v1357
    %1556 = vmatpush1.bf16.msra.mxu0 %v1356
    %1557 = vmatprep.subr.bf16.mxu0 %v1365
    %1558 = vmatpush1.bf16.msra.mxu0 %v1364
    %1559 = vmatprep.subr.bf16.mxu0 %v1373
    %1560 = vmatpush1.bf16.msra.mxu0 %v1372
    %1561 = vmatprep.subr.bf16.mxu0 0
    %1562 = vmatpush1.bf16.msra.mxu0 0
    %1563 = vmatprep.subr.bf16.mxu0 0
    %1564 = vmatpush1.bf16.msra.mxu0 0
    %1565 = vmatprep.subr.bf16.mxu0 0
    %1566 = vmatpush1.bf16.msra.mxu0 0
    %1567 = vmatprep.subr.bf16.mxu0 0
    %1568 = vmatpush1.bf16.msra.mxu0 0
    %1569 = vmatprep.subr.bf16.mxu0 0
    %1570 = vmatpush1.bf16.msra.mxu0 0
    %1571 = vmatprep.subr.bf16.mxu0 0
    %1572 = vmatpush1.bf16.msra.mxu0 0
    %1573 = vmatprep.subr.bf16.mxu0 0
    %1574 = vmatpush1.bf16.msra.mxu0 0
    %1575 = vmatprep.subr.bf16.mxu0 0
    %1576 = vmatpush1.bf16.msra.mxu0 0
    %1577 = vmatprep.subr.bf16.mxu0 0
    %1578 = vmatpush1.bf16.msra.mxu0 0
    %1579 = vmatprep.subr.bf16.mxu0 0
    %1580 = vmatpush1.bf16.msra.mxu0 0
    %1581 = vmatprep.mubr.bf16.mxu0 0
    %1582 = vmatmul.mubr.bf16.gmra.mrb[0].mxu0 %v1424
    %v1583 = vpop.f32.mrb[0].mxu0
    %v1584 = vadd.f32 %v1169, %v1583
    %v1585 = vpop.f32.mrb[0].mxu0
    %v1586 = vadd.f32 %v1173, %v1585
    %v1587 = vpop.f32.mrb[0].mxu0
    %v1588 = vpop.f32.mrb[0].mxu0
    %1589 = vdwg.mxu0
    %v1590 = vmax.f32 %v1461, 0.0
    %v1591 = vmax.f32 %v1463, 0.0
    %v1592 = vmax.f32 %v1502, 0.0
    %v1593 = vmax.f32 %v1504, 0.0
    %v1594 = vmax.f32 %v1543, 0.0
    %v1595 = vmax.f32 %v1545, 0.0
    %v1596 = vmax.f32 %v1584, 0.0
    %v1597 = vmax.f32 %v1586, 0.0
    %v1598 = vpack.c.bf16 %v1592, %v1590
    %v1599 = vpack.c.bf16 %v1593, %v1591
    %v1600 = vpack.c.bf16 %v1596, %v1594
    %v1601 = vpack.c.bf16 %v1597, %v1595
    %v1602 = vld [vmem:[%s8] sm:$0xf]
    %v1603 = vld [vmem:[%s8 + $0x4] sm:$0xf]
    %v1604 = vld [vmem:[%s8 + $0x8] sm:$0xf]
    %v1605 = vld [vmem:[%s8 + $0xc] sm:$0xf]
    %v1606 = vld [vmem:[%s8 + $0x10] sm:$0xf]
    %v1607 = vld [vmem:[%s8 + $0x14] sm:$0xf]
    %v1608 = vld [vmem:[%s8 + $0x18] sm:$0xf]
    %v1609 = vld [vmem:[%s8 + $0x1c] sm:$0xf]
    %v1610 = vld [vmem:[%s8 + $0x20] sm:$0xf]
    %v1611 = vld [vmem:[%s8 + $0x24] sm:$0xf]
    %v1612 = vld [vmem:[%s8 + $0x28] sm:$0xf]
    %v1613 = vld [vmem:[%s8 + $0x2c] sm:$0xf]
    %v1614 = vld [vmem:[%s8 + $0x30] sm:$0xf]
    %v1615 = vld [vmem:[%s8 + $0x34] sm:$0xf]
    %v1616 = vld [vmem:[%s8 + $0x38] sm:$0xf]
    %v1617 = vld [vmem:[%s8 + $0x3c] sm:$0xf]
    %v1618 = vld [vmem:[%s8 + $0x40] sm:$0xf]
    %v1619 = vld [vmem:[%s8 + $0x44] sm:$0xf]
    %v1620 = vld [vmem:[%s8 + $0x48] sm:$0xf]
    %v1621 = vld [vmem:[%s8 + $0x4c] sm:$0xf]
    %v1622 = vld [vmem:[%s8 + $0x50] sm:$0xf]
    %v1623 = vld [vmem:[%s8 + $0x54] sm:$0xf]
    %v1624 = vld [vmem:[%s8 + $0x58] sm:$0xf]
    %v1625 = vld [vmem:[%s8 + $0x5c] sm:$0xf]
    %v1626 = vld [vmem:[%s8 + $0x60] sm:$0xf]
    %v1627 = vld [vmem:[%s8 + $0x64] sm:$0xf]
    %v1628 = vld [vmem:[%s8 + $0x68] sm:$0xf]
    %v1629 = vld [vmem:[%s8 + $0x6c] sm:$0xf]
    %v1630 = vld [vmem:[%s8 + $0x70] sm:$0xf]
    %v1631 = vld [vmem:[%s8 + $0x74] sm:$0xf]
    %v1632 = vld [vmem:[%s8 + $0x78] sm:$0xf]
    %v1633 = vld [vmem:[%s8 + $0x7c] sm:$0xf]
    %v1666 = vunpack.c.l.b16 %v1602
    %v1667 = vunpack.c.l.b16 %v1603
    %v1668 = vunpack.c.l.b16 %v1604
    %v1669 = vunpack.c.l.b16 %v1605
    %v1670 = vunpack.c.l.b16 %v1606
    %v1671 = vunpack.c.l.b16 %v1607
    %v1672 = vunpack.c.l.b16 %v1608
    %v1673 = vunpack.c.l.b16 %v1609
    %v1674 = vunpack.c.l.b16 %v1610
    %v1675 = vunpack.c.l.b16 %v1611
    %v1676 = vunpack.c.l.b16 %v1612
    %v1677 = vunpack.c.l.b16 %v1613
    %v1678 = vunpack.c.l.b16 %v1614
    %v1679 = vunpack.c.l.b16 %v1615
    %v1680 = vunpack.c.l.b16 %v1616
    %v1681 = vunpack.c.l.b16 %v1617
    %v1682 = vunpack.c.l.b16 %v1618
    %v1683 = vunpack.c.l.b16 %v1619
    %v1684 = vunpack.c.l.b16 %v1620
    %v1685 = vunpack.c.l.b16 %v1621
    %v1686 = vunpack.c.l.b16 %v1622
    %v1687 = vunpack.c.l.b16 %v1623
    %v1688 = vunpack.c.l.b16 %v1624
    %v1689 = vunpack.c.l.b16 %v1625
    %v1690 = vunpack.c.l.b16 %v1626
    %v1691 = vunpack.c.l.b16 %v1627
    %v1692 = vunpack.c.l.b16 %v1628
    %v1693 = vunpack.c.l.b16 %v1629
    %v1694 = vunpack.c.l.b16 %v1630
    %v1695 = vunpack.c.l.b16 %v1631
    %v1696 = vunpack.c.l.b16 %v1632
    %v1697 = vunpack.c.l.b16 %v1633
    %v1698 = vpack.c.b16 %v1667, %v1666
    %v1699 = vpack.c.b16 %v1669, %v1668
    %v1700 = vpack.c.b16 %v1671, %v1670
    %v1701 = vpack.c.b16 %v1673, %v1672
    %v1702 = vpack.c.b16 %v1675, %v1674
    %v1703 = vpack.c.b16 %v1677, %v1676
    %v1704 = vpack.c.b16 %v1679, %v1678
    %v1705 = vpack.c.b16 %v1681, %v1680
    %v1706 = vpack.c.b16 %v1683, %v1682
    %v1707 = vpack.c.b16 %v1685, %v1684
    %v1708 = vpack.c.b16 %v1687, %v1686
    %v1709 = vpack.c.b16 %v1689, %v1688
    %v1710 = vpack.c.b16 %v1691, %v1690
    %v1711 = vpack.c.b16 %v1693, %v1692
    %v1712 = vpack.c.b16 %v1695, %v1694
    %v1713 = vpack.c.b16 %v1697, %v1696
    %1730 = vmatprep.subr.bf16.mxu0 0
    %1731 = vmatpush1.bf16.msra.mxu0 %v1698
    %1732 = vmatprep.subr.bf16.mxu0 0
    %1733 = vmatpush1.bf16.msra.mxu0 %v1699
    %1734 = vmatprep.subr.bf16.mxu0 0
    %1735 = vmatpush1.bf16.msra.mxu0 %v1700
    %1736 = vmatprep.subr.bf16.mxu0 0
    %1737 = vmatpush1.bf16.msra.mxu0 %v1701
    %1738 = vmatprep.subr.bf16.mxu0 0
    %1739 = vmatpush1.bf16.msra.mxu0 %v1702
    %1740 = vmatprep.subr.bf16.mxu0 0
    %1741 = vmatpush1.bf16.msra.mxu0 %v1703
    %1742 = vmatprep.subr.bf16.mxu0 0
    %1743 = vmatpush1.bf16.msra.mxu0 %v1704
    %1744 = vmatprep.subr.bf16.mxu0 0
    %1745 = vmatpush1.bf16.msra.mxu0 %v1705
    %1746 = vmatprep.subr.bf16.mxu0 0
    %1747 = vmatpush1.bf16.msra.mxu0 %v1706
    %1748 = vmatprep.subr.bf16.mxu0 0
    %1749 = vmatpush1.bf16.msra.mxu0 %v1707
    %1750 = vmatprep.subr.bf16.mxu0 0
    %1751 = vmatpush1.bf16.msra.mxu0 %v1708
    %1752 = vmatprep.subr.bf16.mxu0 0
    %1753 = vmatpush1.bf16.msra.mxu0 %v1709
    %1754 = vmatprep.subr.bf16.mxu0 0
    %1755 = vmatpush1.bf16.msra.mxu0 %v1710
    %1756 = vmatprep.subr.bf16.mxu0 0
    %1757 = vmatpush1.bf16.msra.mxu0 %v1711
    %1758 = vmatprep.subr.bf16.mxu0 0
    %1759 = vmatpush1.bf16.msra.mxu0 %v1712
    %1760 = vmatprep.subr.bf16.mxu0 0
    %1761 = vmatpush1.bf16.msra.mxu0 %v1713
    %1762 = vmatprep.mubr.bf16.mxu0 %v1599
    %1763 = vmatmul.mubr.bf16.gmra.mrb[0].mxu0 %v1598
    %v1764 = vpop.f32.mrb[0].mxu0
    %v1765 = vadd.f32 0.0, %v1764
    %v1766 = vpop.f32.mrb[0].mxu0
    %v1767 = vpop.f32.mrb[0].mxu0
    %v1768 = vadd.f32 0.0, %v1767
    %v1769 = vpop.f32.mrb[0].mxu0
    %1770 = vmatprep.mubr.bf16.mxu0 %v1601
    %1771 = vmatmul.mubr.bf16.gmra.mrb[0].mxu0 %v1600
    %v1772 = vpop.f32.mrb[0].mxu0
    %v1773 = vadd.f32 0.0, %v1772
    %v1774 = vpop.f32.mrb[0].mxu0
    %v1775 = vpop.f32.mrb[0].mxu0
    %v1776 = vadd.f32 0.0, %v1775
    %v1777 = vpop.f32.mrb[0].mxu0
    %1778 = vdwg.mxu0
    %v1779 = vlaneseq
    %v1780 = vand.u32 %v1779, 127
    %vm1781 = vcmp.lt.s32.totalorder %v1780, 3
    %vm1782 = vcmp.ge.s32.totalorder %v1780, 3
    %vm1783 = vcmp.lt.s32.totalorder %v1780, 6
    %vm1784 = vmand %vm1782, %vm1783
    %vm1785 = vcmp.ge.s32.totalorder %v1780, 6
    %vm1786 = vcmp.lt.s32.totalorder %v1780, 12
    %vm1787 = vmand %vm1785, %vm1786
    %vm1788 = vcmp.ge.s32.totalorder %v1780, 12
    %vm1789 = vcmp.lt.s32.totalorder %v1780, 24
    %vm1790 = vmand %vm1788, %vm1789
    %vm1791 = vcmp.ge.s32.totalorder %v1780, 24
    %vm1792 = vcmp.lt.s32.totalorder %v1780, 28
    %vm1793 = vmand %vm1791, %vm1792
    %v1794 = vsel %vm1783, %v1765, 0.0
    %v1795 = vsel %vm1787, %v1768, 0.0
    %v1796 = vadd.f32 %v1794, %v1795
    %v1797 = vsel %vm1790, %v1773, 0.0
    %v1798 = vadd.f32 %v1796, %v1797
    %v1799 = vsel %vm1793, %v1776, 0.0
    %v1800 = vadd.f32 %v1798, %v1799
    %v1801 = vlaneseq
    %v1802 = vshrl.u32 %v1801, 7
    %v1803 = vsub.s32 0, %v1802
    %v1804 = vrot.slane %v117, %v1803
    %v1805 = vadd.f32 %v1800, %v1804
    %v1806 = vsel %vm1781, %v1805, -1e+30
    %1807 = vmax.xlane.f32.xlu0 %v1806
    %v1808 = vpop.xlane.xlu0 %1807
    %v1809 = vsub.f32 %v1805, %v1808
    %v1810 = vmul.f32 %v1809, 1.442695
    %v1811 = vpow.pop %v1810
    %v1812 = vsel %vm1784, %v1811, 0.0
    %1813 = vadd.xlane.f32.xlu0 %v1812
    %v1814 = vpop.xlane.xlu0 %1813
    %v1815 = vrcp.pop %v1814
    %v1816 = vmul.f32 %v1812, %v1815
    %1818 = vrot.lane.b32.xlu0 %v1805, 127
    %v1819 = vpop.permute.xlu0 %1818
    %v1821 = vmax.f32 %v1805, %v1819
    %1823 = vrot.lane.b32.xlu0 %v1821, 127
    %v1824 = vpop.permute.xlu0 %1823
    %vm1826 = vcmp.ge.f32.partialorder %v1805, %v1824
    %vm1827 = vmxor %vm1826, 1
    %vm1828 = vcmp.ge.f32.partialorder %v1805, %v1819
    %v1829 = vsel %vm1828, 1, 0
    %1830 = vrot.lane.b32.xlu0 %v1829, 127
    %v1831 = vpop.permute.xlu0 %1830
    %vm1832 = vcmp.ne.s32.totalorder %v1831, 0
    %vm1833 = vmand %vm1827, %vm1832
    %vm1834 = vmxor %vm1833, 1
    %vm1835 = vmand %vm1827, %vm1834
    %v1836 = vsel %vm1826, 1, 0
    %1837 = vset.pattern.permute.xlu0 0
    %1838 = vperm.xlu0 %1837, %v1836
    %v1839 = vpop.permute.xlu0 %1838
    %vm1840 = vcmp.eq.s32.totalorder %v1839, 1
    %vm1841 = vmand %vm1840, %vm1787
    %v1842 = vsel %vm1833, 1, 0
    %1843 = vset.pattern.permute.xlu0 0
    %1844 = vperm.xlu0 %1843, %v1842
    %v1845 = vpop.permute.xlu0 %1844
    %vm1846 = vcmp.eq.s32.totalorder %v1845, 1
    %vm1847 = vmand %vm1846, %vm1790
    %vm1848 = vmor %vm1841, %vm1847
    %v1849 = vsel %vm1835, 1, 0
    %1850 = vset.pattern.permute.xlu0 0
    %1851 = vperm.xlu0 %1850, %v1849
    %v1852 = vpop.permute.xlu0 %1851
    %vm1853 = vcmp.eq.s32.totalorder %v1852, 1
    %vm1854 = vmand %vm1853, %vm1793
    %vm1855 = vmor %vm1848, %vm1854
    %v1856 = vxor.u32 %v1805, 2147483648
    %v1857 = vmul.f32 %v1856, 1.442695
    %v1858 = vpow.pop %v1857
    %v1859 = vadd.f32 %v1858, 1.0
    %v1860 = vrcp.pop %v1859
    %v1861 = vmul.f32 1.0, %v1860
    %v1862 = vsel %vm1855, %v1861, 0.0
    %v1863 = vsel %vm1781, %v1805, 0.0
    %v1864 = vadd.f32 %v1863, %v1816
    %v1865 = vadd.f32 %v1864, %v1862
    %1866 = vst [vmem:[#allocation11] sm:$0xff] %v1865
    // Predicated region
    $region58: #{tpu_custom_call.1} parent=1 // pred_check
      _
    $region59: #{tpu_custom_call.1} parent=1 // pred_check_branch
      %1868 = sbr.rel (0) target = $region61
    $region60: #{tpu_custom_call.1} parent=1 // pred_region
      %s1870 = ssub.s32 128, 128
      %1871 = vsyncadd [#allocation4], %s1870
      %s1873 = sshll.u32 [#allocation11], 4
      %s1874 = int_to_ptr.vmem [resolvable:$true] %s1873
      %1876 = dma.vmem_to_hbm [thread:$0]  %s1874, 128, %s9, [#allocation4]
    $region61: #{tpu_custom_call.1} parent=1 // pred_fallthru
      _
    // Predicated region
    $region62: #{tpu_custom_call.1} parent=1 // pred_check
      _
    $region63: #{tpu_custom_call.1} parent=1 // pred_check_branch
      %1878 = sbr.rel (0) target = $region65
    $region64: #{tpu_custom_call.1} parent=1 // pred_region
      %1879 = dma.done [#allocation4], 128
    $region65: #{tpu_custom_call.1} parent=1 // pred_fallthru
      _
    %1880 = vsyncpa [#allocation3], 1
    %1881 = vsyncpa [#allocation6], 1
    %1882 = vsyncpa [#allocation9], 1
    %1883 = vsyncpa [#allocation4], 1

</llo_original>
